<compile_context>
chip_gen: v6e
topology: v6e:2x2x1
jax: 0.10.0
libtpu: 0.0.40
codegen_flags: <defaults>
</compile_context>

<pallas_src>
import functools

import jax
import jax.numpy as jnp
import numpy as np
from jax import lax
from jax.experimental import pallas as pl
from jax.experimental.pallas import tpu as pltpu


# ---------------------------------------------------------------------------
# Pass 1: folded (depthwise x pointwise) conv + per-tile BN partial statistics
# ---------------------------------------------------------------------------
def _conv_stats_kernel(x_ref, w_ref, b_ref, y_ref, psum_ref, psq_ref, col_ref,
                       *, kh, kw, dilation, th, wo, cin, cout):
    """Grid = (N, Ho // TH).

    x_ref    : (Hp, Wp, Cin)          zero-padded image of this batch element
    w_ref    : (kh*kw*Cin, Cout)      combined weight  w_dw[c,tap] * w_pw[o,c]
    b_ref    : (1, Cout)              combined bias    b_pw + w_pw @ b_dw
    y_ref    : (TH, Wo*Cout)          lane-dense conv output tile
    psum_ref : (1, 1, 1, Cout)        per-tile sum of y        (for BN stats)
    psq_ref  : (1, 1, 1, Cout)        per-tile sum of y*y      (for BN stats)
    col_ref  : (TH*Wo, kh*kw*Cin)     VMEM scratch holding the im2col tile
    """
    t = pl.program_id(1)
    row0 = pl.multiple_of(t * th, th)              # stride == 1
    th_in = th + (kh - 1) * dilation

    # Row slab (with halo) needed by this output row-tile.
    xin = x_ref[pl.ds(row0, th_in), :, :]          # (th_in, Wp, Cin)

    # Build the im2col tile in VMEM: column block `tap` holds the shifted
    # (TH*Wo, Cin) patch for kernel tap (i, j).
    for i in range(kh):
        for j in range(kw):
            tap = i * kw + j
            patch = xin[i * dilation:i * dilation + th,
                        j * dilation:j * dilation + wo, :]       # (th, wo, cin)
            col_ref[:, tap * cin:(tap + 1) * cin] = patch.reshape(th * wo, cin)

    # Single folded matmul on the MXU: (TH*Wo, K) x (K, Cout), K = kh*kw*Cin.
    y = jnp.dot(col_ref[...], w_ref[...], preferred_element_type=jnp.float32)
    y = y + b_ref[...]                             # (th*wo, cout)

    # Per-tile BatchNorm partial statistics (globally reduced in the wrapper).
    psum_ref[...] = jnp.sum(y, axis=0).reshape(1, 1, 1, cout)
    psq_ref[...] = jnp.sum(y * y, axis=0).reshape(1, 1, 1, cout)

    # Lane-dense pack: (TH*Wo, Cout) -> (TH, Wo*Cout) channel interleave,
    # written as Wo narrow column stores into the dense VMEM output block
    # (the HBM DMA of the block itself is fully dense / unmasked).
    y3 = y.reshape(th, wo, cout)
    for w in range(wo):
        y_ref[:, w * cout:(w + 1) * cout] = y3[:, w, :]


# ---------------------------------------------------------------------------
# Pass 2: apply the global BatchNorm affine, lane-dense elementwise
# ---------------------------------------------------------------------------
def _bn_apply_kernel(y_ref, scale_ref, shift_ref, out_ref):
    out_ref[...] = y_ref[...] * scale_ref[...] + shift_ref[...]


def _pick_tile_h(ho, wo, cin, kh, kw, budget_bytes=4 * 1024 * 1024):
    """Largest multiple-of-8 divisor of Ho giving >=2 row-tiles while keeping
    the im2col scratch under `budget_bytes` (VMEM-friendly on v7x's 64 MiB)."""
    for th in (512, 256, 128, 64, 32, 16, 8):
        if ho % th == 0 and ho // th >= 2:
            if th * wo * kh * kw * cin * 4 <= budget_bytes:
                return th
    return ho


def dsc_with_bn_forward(x_nchw, w_dw, b_dw, w_pw, b_pw, gamma, beta,
                        *, stride=1, padding=1, dilation=1, eps=1e-5):
    """dsc_with_bn forward.  x_nchw: (N, Cin, H, W) f32 -> (N, Cout, Ho, Wo).

    w_dw: (Cin, 1, KH, KW)   PyTorch depthwise conv weight (groups=Cin)
    w_pw: (Cout, Cin, 1, 1)  PyTorch pointwise conv weight
    BatchNorm runs in training mode (batch statistics over N,H,W).
    """
    if stride != 1:
        # TODO(synk): stride>1 (never used by DFANet's dsc_with_bn blocks)
        # would need strided pl.ds gathers in the im2col build.
        raise NotImplementedError("dsc_with_bn in DFANet always uses stride=1")

    N, Cin, H, W = x_nchw.shape
    Cout = w_pw.shape[0]
    KH, KW = int(w_dw.shape[2]), int(w_dw.shape[3])
    Ho = H + 2 * padding - dilation * (KH - 1)
    Wo = W + 2 * padding - dilation * (KW - 1)

    # ---- layout glue: NCHW -> zero-padded NHWC (channels on lanes) ----
    # TODO(synk): callers that can supply/accept NHWC directly skip these
    # transposes and the pad round-trip through HBM.
    x_nhwc = jnp.transpose(x_nchw, (0, 2, 3, 1)).astype(jnp.float32)
    x_pad = jnp.pad(x_nhwc, ((0, 0), (padding, padding),
                             (padding, padding), (0, 0)))
    Hp, Wp = int(x_pad.shape[1]), int(x_pad.shape[2])

    # ---- fold depthwise into pointwise: one (KH*KW*Cin, Cout) weight ----
    w_dw_t = jnp.transpose(w_dw[:, 0], (1, 2, 0)).reshape(KH * KW, Cin)
    w_pw2d = w_pw[:, :, 0, 0]                                    # (Cout, Cin)
    w_comb = (w_dw_t[:, :, None] * jnp.transpose(w_pw2d)[None, :, :]
              ).reshape(KH * KW * Cin, Cout).astype(jnp.float32)
    b_comb = (b_pw + w_pw2d @ b_dw).reshape(1, Cout).astype(jnp.float32)

    TH = _pick_tile_h(Ho, Wo, Cin, KH, KW)
    num_t = Ho // TH
    WoC = Wo * Cout

    conv_kernel = functools.partial(
        _conv_stats_kernel, kh=KH, kw=KW, dilation=dilation,
        th=TH, wo=Wo, cin=Cin, cout=Cout)

    cparams = pltpu.CompilerParams(
        dimension_semantics=("parallel", "arbitrary"),
        vmem_limit_bytes=32 * 1024 * 1024)

    y_ld, psum, psq = pl.pallas_call(
        conv_kernel,
        grid=(N, num_t),
        in_specs=[
            pl.BlockSpec((None, Hp, Wp, Cin), lambda n, t: (n, 0, 0, 0)),
            pl.BlockSpec((KH * KW * Cin, Cout), lambda n, t: (0, 0)),
            pl.BlockSpec((1, Cout), lambda n, t: (0, 0)),
        ],
        out_specs=[
            pl.BlockSpec((None, TH, WoC), lambda n, t: (n, t, 0)),
            pl.BlockSpec((1, 1, 1, Cout), lambda n, t: (n, t, 0, 0)),
            pl.BlockSpec((1, 1, 1, Cout), lambda n, t: (n, t, 0, 0)),
        ],
        out_shape=[
            jax.ShapeDtypeStruct((N, Ho, WoC), jnp.float32),
            jax.ShapeDtypeStruct((N, num_t, 1, Cout), jnp.float32),
            jax.ShapeDtypeStruct((N, num_t, 1, Cout), jnp.float32),
        ],
        scratch_shapes=[pltpu.VMEM((TH * Wo, KH * KW * Cin), jnp.float32)],
        compiler_params=cparams,
    )(x_pad, w_comb, b_comb)

    # ---- global BN statistics from the per-tile partials (tiny, plain JAX) --
    m_total = float(N * Ho * Wo)
    mean = jnp.sum(psum, axis=(0, 1, 2)) / m_total               # (Cout,)
    var = jnp.sum(psq, axis=(0, 1, 2)) / m_total - mean * mean
    scale = gamma.astype(jnp.float32) * lax.rsqrt(var + eps)
    shift = beta.astype(jnp.float32) - mean * scale
    scale_ld = jnp.tile(scale, (Wo,)).reshape(1, WoC)            # lane-dense
    shift_ld = jnp.tile(shift, (Wo,)).reshape(1, WoC)

    out_ld = pl.pallas_call(
        _bn_apply_kernel,
        grid=(N, num_t),
        in_specs=[
            pl.BlockSpec((None, TH, WoC), lambda n, t: (n, t, 0)),
            pl.BlockSpec((1, WoC), lambda n, t: (0, 0)),
            pl.BlockSpec((1, WoC), lambda n, t: (0, 0)),
        ],
        out_specs=pl.BlockSpec((None, TH, WoC), lambda n, t: (n, t, 0)),
        out_shape=jax.ShapeDtypeStruct((N, Ho, WoC), jnp.float32),
        compiler_params=cparams,
    )(y_ld, scale_ld, shift_ld)

    out_nhwc = out_ld.reshape(N, Ho, Wo, Cout)
    return jnp.transpose(out_nhwc, (0, 3, 1, 2))                 # back to NCHW


def _reference_forward(x, w_dw, b_dw, w_pw, b_pw, gamma, beta,
                       *, stride, padding, dilation, eps):
    """Pure-JAX reference (NCHW) for correctness check."""
    Cin = x.shape[1]
    y = lax.conv_general_dilated(
        x, w_dw, (stride, stride), [(padding, padding)] * 2,
        rhs_dilation=(dilation, dilation),
        dimension_numbers=("NCHW", "OIHW", "NCHW"),
        feature_group_count=Cin)
    y = y + b_dw[None, :, None, None]
    y = lax.conv_general_dilated(
        y, w_pw, (1, 1), [(0, 0)] * 2,
        dimension_numbers=("NCHW", "OIHW", "NCHW"))
    y = y + b_pw[None, :, None, None]
    mean = jnp.mean(y, axis=(0, 2, 3), keepdims=True)
    var = jnp.mean((y - mean) ** 2, axis=(0, 2, 3), keepdims=True)
    y = (y - mean) * lax.rsqrt(var + eps)
    return y * gamma[None, :, None, None] + beta[None, :, None, None]


if __name__ == "__main__":
    # dsc_with_bn(in_channels=4, out_channels=8, ksize=3, stride=1, padding=1)
    N, Cin, H, W = 2, 4, 16, 16
    Cout, K = 8, 3
    stride, padding, dilation, eps = 1, 1, 1, 1e-5

    key = jax.random.PRNGKey(0)
    k1, k2, k3, k4, k5 = jax.random.split(key, 5)

    x = jax.random.normal(k1, (N, Cin, H, W), jnp.float32)
    w_dw = jax.random.normal(k2, (Cin, 1, K, K), jnp.float32) * 0.3
    b_dw = jax.random.normal(k3, (Cin,), jnp.float32) * 0.1
    w_pw = jax.random.normal(k4, (Cout, Cin, 1, 1), jnp.float32) * 0.3
    b_pw = jax.random.normal(k5, (Cout,), jnp.float32) * 0.1
    gamma = jnp.ones((Cout,), jnp.float32)   # BatchNorm2d default init
    beta = jnp.zeros((Cout,), jnp.float32)

    out = dsc_with_bn_forward(x, w_dw, b_dw, w_pw, b_pw, gamma, beta,
                              stride=stride, padding=padding,
                              dilation=dilation, eps=eps)
    out = jax.block_until_ready(out)

    ref = _reference_forward(x, w_dw, b_dw, w_pw, b_pw, gamma, beta,
                             stride=stride, padding=padding,
                             dilation=dilation, eps=eps)
    ref = jax.block_until_ready(ref)

    np.testing.assert_allclose(np.asarray(out), np.asarray(ref),
                               rtol=1e-3, atol=1e-3)
    print("KERNEL_OK")
</pallas_src>

<mosaic_0001>
module attributes {stable_mosaic.version = 11 : i64} {
  func.func @_conv_stats_kernel(%arg0: i32, %arg1: i32, %arg2: memref<1x18x18x4xf32, #tpu.memory_space<vmem>>, %arg3: memref<36x8xf32, #tpu.memory_space<vmem>>, %arg4: memref<1x8xf32, #tpu.memory_space<vmem>>, %arg5: memref<1x8x128xf32, #tpu.memory_space<vmem>>, %arg6: memref<1x1x1x8xf32, #tpu.memory_space<vmem>>, %arg7: memref<1x1x1x8xf32, #tpu.memory_space<vmem>>, %arg8: memref<128x36xf32, #tpu.memory_space<vmem>>) attributes {dimension_semantics = [#tpu.dimension_semantics<parallel>, #tpu.dimension_semantics<arbitrary>], iteration_bounds = array<i64: 2, 2>, scalar_prefetch = 0 : i64, scratch_operands = 1 : i64, tpu.core_type = #tpu.core_type<tc>, window_params = [{transform_indices = @transform_0, window_bounds = array<i64: 1, 18, 18, 4>}, {pipeline_mode = #tpu.pipeline_mode<synchronous>, transform_indices = @transform_1, window_bounds = array<i64: 36, 8>}, {pipeline_mode = #tpu.pipeline_mode<synchronous>, transform_indices = @transform_2, window_bounds = array<i64: 1, 8>}, {transform_indices = @transform_3, window_bounds = array<i64: 1, 8, 128>}, {transform_indices = @transform_4, window_bounds = array<i64: 1, 1, 1, 8>}, {transform_indices = @transform_5, window_bounds = array<i64: 1, 1, 1, 8>}]} {
    %c8_i32 = arith.constant 8 : i32
    %0 = arith.muli %arg1, %c8_i32 : i32
    %1 = tpu.assume_multiple %0, 8 : i32
    %c0 = arith.constant 0 : index
    %2 = arith.index_cast %1 : i32 to index
    %c0_0 = arith.constant 0 : index
    %c0_1 = arith.constant 0 : index
    %3 = vector.load %arg2[%c0, %2, %c0_0, %c0_1] : memref<1x18x18x4xf32, #tpu.memory_space<vmem>>, vector<1x10x18x4xf32>
    %4 = vector.shape_cast %3 : vector<1x10x18x4xf32> to vector<10x18x4xf32>
    %5 = vector.extract_strided_slice %4 {offsets = [0, 0, 0], sizes = [8, 16, 4], strides = [1, 1, 1]} : vector<10x18x4xf32> to vector<8x16x4xf32>
    %6 = vector.shape_cast %5 : vector<8x16x4xf32> to vector<128x4xf32>
    %c0_2 = arith.constant 0 : index
    %c0_3 = arith.constant 0 : index
    %7 = vector.load %arg8[%c0_2, %c0_3] : memref<128x36xf32, #tpu.memory_space<vmem>>, vector<128x4xf32>
    tpu.vector_store %arg8[%c0_2, %c0_3], %6 {strides = array<i32>} : memref<128x36xf32, #tpu.memory_space<vmem>>, vector<128x4xf32>,
    %8 = vector.extract_strided_slice %4 {offsets = [0, 1, 0], sizes = [8, 16, 4], strides = [1, 1, 1]} : vector<10x18x4xf32> to vector<8x16x4xf32>
    %9 = vector.shape_cast %8 : vector<8x16x4xf32> to vector<128x4xf32>
    %c0_4 = arith.constant 0 : index
    %c4 = arith.constant 4 : index
    %10 = vector.load %arg8[%c0_4, %c4] : memref<128x36xf32, #tpu.memory_space<vmem>>, vector<128x4xf32>
    tpu.vector_store %arg8[%c0_4, %c4], %9 {strides = array<i32>} : memref<128x36xf32, #tpu.memory_space<vmem>>, vector<128x4xf32>,
    %11 = vector.extract_strided_slice %4 {offsets = [0, 2, 0], sizes = [8, 16, 4], strides = [1, 1, 1]} : vector<10x18x4xf32> to vector<8x16x4xf32>
    %12 = vector.shape_cast %11 : vector<8x16x4xf32> to vector<128x4xf32>
    %c0_5 = arith.constant 0 : index
    %c8 = arith.constant 8 : index
    %13 = vector.load %arg8[%c0_5, %c8] : memref<128x36xf32, #tpu.memory_space<vmem>>, vector<128x4xf32>
    tpu.vector_store %arg8[%c0_5, %c8], %12 {strides = array<i32>} : memref<128x36xf32, #tpu.memory_space<vmem>>, vector<128x4xf32>,
    %14 = vector.extract_strided_slice %4 {offsets = [1, 0, 0], sizes = [8, 16, 4], strides = [1, 1, 1]} : vector<10x18x4xf32> to vector<8x16x4xf32>
    %15 = vector.shape_cast %14 : vector<8x16x4xf32> to vector<128x4xf32>
    %c0_6 = arith.constant 0 : index
    %c12 = arith.constant 12 : index
    %16 = vector.load %arg8[%c0_6, %c12] : memref<128x36xf32, #tpu.memory_space<vmem>>, vector<128x4xf32>
    tpu.vector_store %arg8[%c0_6, %c12], %15 {strides = array<i32>} : memref<128x36xf32, #tpu.memory_space<vmem>>, vector<128x4xf32>,
    %17 = vector.extract_strided_slice %4 {offsets = [1, 1, 0], sizes = [8, 16, 4], strides = [1, 1, 1]} : vector<10x18x4xf32> to vector<8x16x4xf32>
    %18 = vector.shape_cast %17 : vector<8x16x4xf32> to vector<128x4xf32>
    %c0_7 = arith.constant 0 : index
    %c16 = arith.constant 16 : index
    %19 = vector.load %arg8[%c0_7, %c16] : memref<128x36xf32, #tpu.memory_space<vmem>>, vector<128x4xf32>
    tpu.vector_store %arg8[%c0_7, %c16], %18 {strides = array<i32>} : memref<128x36xf32, #tpu.memory_space<vmem>>, vector<128x4xf32>,
    %20 = vector.extract_strided_slice %4 {offsets = [1, 2, 0], sizes = [8, 16, 4], strides = [1, 1, 1]} : vector<10x18x4xf32> to vector<8x16x4xf32>
    %21 = vector.shape_cast %20 : vector<8x16x4xf32> to vector<128x4xf32>
    %c0_8 = arith.constant 0 : index
    %c20 = arith.constant 20 : index
    %22 = vector.load %arg8[%c0_8, %c20] : memref<128x36xf32, #tpu.memory_space<vmem>>, vector<128x4xf32>
    tpu.vector_store %arg8[%c0_8, %c20], %21 {strides = array<i32>} : memref<128x36xf32, #tpu.memory_space<vmem>>, vector<128x4xf32>,
    %23 = vector.extract_strided_slice %4 {offsets = [2, 0, 0], sizes = [8, 16, 4], strides = [1, 1, 1]} : vector<10x18x4xf32> to vector<8x16x4xf32>
    %24 = vector.shape_cast %23 : vector<8x16x4xf32> to vector<128x4xf32>
    %c0_9 = arith.constant 0 : index
    %c24 = arith.constant 24 : index
    %25 = vector.load %arg8[%c0_9, %c24] : memref<128x36xf32, #tpu.memory_space<vmem>>, vector<128x4xf32>
    tpu.vector_store %arg8[%c0_9, %c24], %24 {strides = array<i32>} : memref<128x36xf32, #tpu.memory_space<vmem>>, vector<128x4xf32>,
    %26 = vector.extract_strided_slice %4 {offsets = [2, 1, 0], sizes = [8, 16, 4], strides = [1, 1, 1]} : vector<10x18x4xf32> to vector<8x16x4xf32>
    %27 = vector.shape_cast %26 : vector<8x16x4xf32> to vector<128x4xf32>
    %c0_10 = arith.constant 0 : index
    %c28 = arith.constant 28 : index
    %28 = vector.load %arg8[%c0_10, %c28] : memref<128x36xf32, #tpu.memory_space<vmem>>, vector<128x4xf32>
    tpu.vector_store %arg8[%c0_10, %c28], %27 {strides = array<i32>} : memref<128x36xf32, #tpu.memory_space<vmem>>, vector<128x4xf32>,
    %29 = vector.extract_strided_slice %4 {offsets = [2, 2, 0], sizes = [8, 16, 4], strides = [1, 1, 1]} : vector<10x18x4xf32> to vector<8x16x4xf32>
    %30 = vector.shape_cast %29 : vector<8x16x4xf32> to vector<128x4xf32>
    %c0_11 = arith.constant 0 : index
    %c32 = arith.constant 32 : index
    %31 = vector.load %arg8[%c0_11, %c32] : memref<128x36xf32, #tpu.memory_space<vmem>>, vector<128x4xf32>
    tpu.vector_store %arg8[%c0_11, %c32], %30 {strides = array<i32>} : memref<128x36xf32, #tpu.memory_space<vmem>>, vector<128x4xf32>,
    %c0_12 = arith.constant 0 : index
    %c0_13 = arith.constant 0 : index
    %32 = vector.load %arg8[%c0_12, %c0_13] : memref<128x36xf32, #tpu.memory_space<vmem>>, vector<128x36xf32>
    %c0_14 = arith.constant 0 : index
    %c0_15 = arith.constant 0 : index
    %33 = vector.load %arg3[%c0_14, %c0_15] : memref<36x8xf32, #tpu.memory_space<vmem>>, vector<36x8xf32>
    %cst = arith.constant dense<0.000000e+00> : vector<128x8xf32>
    %34 = tpu.matmul %32, %33, %cst {dimension_numbers = #tpu.dot_dimension_numbers<[1], [0], [0], [1], [0, 0, 1, 1], [], []>} : vector<128x36xf32>, vector<36x8xf32>, vector<128x8xf32> -> vector<128x8xf32>
    %c0_16 = arith.constant 0 : index
    %c0_17 = arith.constant 0 : index
    %35 = vector.load %arg4[%c0_16, %c0_17] : memref<1x8xf32, #tpu.memory_space<vmem>>, vector<1x8xf32>
    %36 = vector.broadcast %35 : vector<1x8xf32> to vector<128x8xf32>
    %37 = arith.addf %34, %36 : vector<128x8xf32>
    %cst_18 = arith.constant dense<0.000000e+00> : vector<8xf32>
    %38 = vector.multi_reduction <add>, %37, %cst_18 [0] : vector<128x8xf32> to vector<8xf32>
    %39 = vector.shape_cast %38 : vector<8xf32> to vector<1x1x1x8xf32>
    %c0_19 = arith.constant 0 : index
    %c0_20 = arith.constant 0 : index
    %c0_21 = arith.constant 0 : index
    %c0_22 = arith.constant 0 : index
    %40 = vector.load %arg6[%c0_19, %c0_20, %c0_21, %c0_22] : memref<1x1x1x8xf32, #tpu.memory_space<vmem>>, vector<1x1x1x8xf32>
    tpu.vector_store %arg6[%c0_19, %c0_20, %c0_21, %c0_22], %39 {strides = array<i32>} : memref<1x1x1x8xf32, #tpu.memory_space<vmem>>, vector<1x1x1x8xf32>,
    %41 = arith.mulf %37, %37 : vector<128x8xf32>
    %cst_23 = arith.constant dense<0.000000e+00> : vector<8xf32>
    %42 = vector.multi_reduction <add>, %41, %cst_23 [0] : vector<128x8xf32> to vector<8xf32>
    %43 = vector.shape_cast %42 : vector<8xf32> to vector<1x1x1x8xf32>
    %c0_24 = arith.constant 0 : index
    %c0_25 = arith.constant 0 : index
    %c0_26 = arith.constant 0 : index
    %c0_27 = arith.constant 0 : index
    %44 = vector.load %arg7[%c0_24, %c0_25, %c0_26, %c0_27] : memref<1x1x1x8xf32, #tpu.memory_space<vmem>>, vector<1x1x1x8xf32>
    tpu.vector_store %arg7[%c0_24, %c0_25, %c0_26, %c0_27], %43 {strides = array<i32>} : memref<1x1x1x8xf32, #tpu.memory_space<vmem>>, vector<1x1x1x8xf32>,
    %45 = vector.shape_cast %37 : vector<128x8xf32> to vector<8x16x8xf32>
    %46 = vector.extract_strided_slice %45 {offsets = [0, 0, 0], sizes = [8, 1, 8], strides = [1, 1, 1]} : vector<8x16x8xf32> to vector<8x1x8xf32>
    %47 = vector.shape_cast %46 : vector<8x1x8xf32> to vector<8x8xf32>
    %c0_28 = arith.constant 0 : index
    %c0_29 = arith.constant 0 : index
    %c0_30 = arith.constant 0 : index
    %48 = vector.load %arg5[%c0_28, %c0_29, %c0_30] : memref<1x8x128xf32, #tpu.memory_space<vmem>>, vector<1x8x8xf32>
    %49 = vector.shape_cast %48 : vector<1x8x8xf32> to vector<8x8xf32>
    %50 = vector.shape_cast %47 : vector<8x8xf32> to vector<1x8x8xf32>
    tpu.vector_store %arg5[%c0_28, %c0_29, %c0_30], %50 {strides = array<i32>} : memref<1x8x128xf32, #tpu.memory_space<vmem>>, vector<1x8x8xf32>,
    %51 = vector.extract_strided_slice %45 {offsets = [0, 1, 0], sizes = [8, 1, 8], strides = [1, 1, 1]} : vector<8x16x8xf32> to vector<8x1x8xf32>
    %52 = vector.shape_cast %51 : vector<8x1x8xf32> to vector<8x8xf32>
    %c0_31 = arith.constant 0 : index
    %c0_32 = arith.constant 0 : index
    %c8_33 = arith.constant 8 : index
    %53 = vector.load %arg5[%c0_31, %c0_32, %c8_33] : memref<1x8x128xf32, #tpu.memory_space<vmem>>, vector<1x8x8xf32>
    %54 = vector.shape_cast %53 : vector<1x8x8xf32> to vector<8x8xf32>
    %55 = vector.shape_cast %52 : vector<8x8xf32> to vector<1x8x8xf32>
    tpu.vector_store %arg5[%c0_31, %c0_32, %c8_33], %55 {strides = array<i32>} : memref<1x8x128xf32, #tpu.memory_space<vmem>>, vector<1x8x8xf32>,
    %56 = vector.extract_strided_slice %45 {offsets = [0, 2, 0], sizes = [8, 1, 8], strides = [1, 1, 1]} : vector<8x16x8xf32> to vector<8x1x8xf32>
    %57 = vector.shape_cast %56 : vector<8x1x8xf32> to vector<8x8xf32>
    %c0_34 = arith.constant 0 : index
    %c0_35 = arith.constant 0 : index
    %c16_36 = arith.constant 16 : index
    %58 = vector.load %arg5[%c0_34, %c0_35, %c16_36] : memref<1x8x128xf32, #tpu.memory_space<vmem>>, vector<1x8x8xf32>
    %59 = vector.shape_cast %58 : vector<1x8x8xf32> to vector<8x8xf32>
    %60 = vector.shape_cast %57 : vector<8x8xf32> to vector<1x8x8xf32>
    tpu.vector_store %arg5[%c0_34, %c0_35, %c16_36], %60 {strides = array<i32>} : memref<1x8x128xf32, #tpu.memory_space<vmem>>, vector<1x8x8xf32>,
    %61 = vector.extract_strided_slice %45 {offsets = [0, 3, 0], sizes = [8, 1, 8], strides = [1, 1, 1]} : vector<8x16x8xf32> to vector<8x1x8xf32>
    %62 = vector.shape_cast %61 : vector<8x1x8xf32> to vector<8x8xf32>
    %c0_37 = arith.constant 0 : index
    %c0_38 = arith.constant 0 : index
    %c24_39 = arith.constant 24 : index
    %63 = vector.load %arg5[%c0_37, %c0_38, %c24_39] : memref<1x8x128xf32, #tpu.memory_space<vmem>>, vector<1x8x8xf32>
    %64 = vector.shape_cast %63 : vector<1x8x8xf32> to vector<8x8xf32>
    %65 = vector.shape_cast %62 : vector<8x8xf32> to vector<1x8x8xf32>
    tpu.vector_store %arg5[%c0_37, %c0_38, %c24_39], %65 {strides = array<i32>} : memref<1x8x128xf32, #tpu.memory_space<vmem>>, vector<1x8x8xf32>,
    %66 = vector.extract_strided_slice %45 {offsets = [0, 4, 0], sizes = [8, 1, 8], strides = [1, 1, 1]} : vector<8x16x8xf32> to vector<8x1x8xf32>
    %67 = vector.shape_cast %66 : vector<8x1x8xf32> to vector<8x8xf32>
    %c0_40 = arith.constant 0 : index
    %c0_41 = arith.constant 0 : index
    %c32_42 = arith.constant 32 : index
    %68 = vector.load %arg5[%c0_40, %c0_41, %c32_42] : memref<1x8x128xf32, #tpu.memory_space<vmem>>, vector<1x8x8xf32>
    %69 = vector.shape_cast %68 : vector<1x8x8xf32> to vector<8x8xf32>
    %70 = vector.shape_cast %67 : vector<8x8xf32> to vector<1x8x8xf32>
    tpu.vector_store %arg5[%c0_40, %c0_41, %c32_42], %70 {strides = array<i32>} : memref<1x8x128xf32, #tpu.memory_space<vmem>>, vector<1x8x8xf32>,
    %71 = vector.extract_strided_slice %45 {offsets = [0, 5, 0], sizes = [8, 1, 8], strides = [1, 1, 1]} : vector<8x16x8xf32> to vector<8x1x8xf32>
    %72 = vector.shape_cast %71 : vector<8x1x8xf32> to vector<8x8xf32>
    %c0_43 = arith.constant 0 : index
    %c0_44 = arith.constant 0 : index
    %c40 = arith.constant 40 : index
    %73 = vector.load %arg5[%c0_43, %c0_44, %c40] : memref<1x8x128xf32, #tpu.memory_space<vmem>>, vector<1x8x8xf32>
    %74 = vector.shape_cast %73 : vector<1x8x8xf32> to vector<8x8xf32>
    %75 = vector.shape_cast %72 : vector<8x8xf32> to vector<1x8x8xf32>
    tpu.vector_store %arg5[%c0_43, %c0_44, %c40], %75 {strides = array<i32>} : memref<1x8x128xf32, #tpu.memory_space<vmem>>, vector<1x8x8xf32>,
    %76 = vector.extract_strided_slice %45 {offsets = [0, 6, 0], sizes = [8, 1, 8], strides = [1, 1, 1]} : vector<8x16x8xf32> to vector<8x1x8xf32>
    %77 = vector.shape_cast %76 : vector<8x1x8xf32> to vector<8x8xf32>
    %c0_45 = arith.constant 0 : index
    %c0_46 = arith.constant 0 : index
    %c48 = arith.constant 48 : index
    %78 = vector.load %arg5[%c0_45, %c0_46, %c48] : memref<1x8x128xf32, #tpu.memory_space<vmem>>, vector<1x8x8xf32>
    %79 = vector.shape_cast %78 : vector<1x8x8xf32> to vector<8x8xf32>
    %80 = vector.shape_cast %77 : vector<8x8xf32> to vector<1x8x8xf32>
    tpu.vector_store %arg5[%c0_45, %c0_46, %c48], %80 {strides = array<i32>} : memref<1x8x128xf32, #tpu.memory_space<vmem>>, vector<1x8x8xf32>,
    %81 = vector.extract_strided_slice %45 {offsets = [0, 7, 0], sizes = [8, 1, 8], strides = [1, 1, 1]} : vector<8x16x8xf32> to vector<8x1x8xf32>
    %82 = vector.shape_cast %81 : vector<8x1x8xf32> to vector<8x8xf32>
    %c0_47 = arith.constant 0 : index
    %c0_48 = arith.constant 0 : index
    %c56 = arith.constant 56 : index
    %83 = vector.load %arg5[%c0_47, %c0_48, %c56] : memref<1x8x128xf32, #tpu.memory_space<vmem>>, vector<1x8x8xf32>
    %84 = vector.shape_cast %83 : vector<1x8x8xf32> to vector<8x8xf32>
    %85 = vector.shape_cast %82 : vector<8x8xf32> to vector<1x8x8xf32>
    tpu.vector_store %arg5[%c0_47, %c0_48, %c56], %85 {strides = array<i32>} : memref<1x8x128xf32, #tpu.memory_space<vmem>>, vector<1x8x8xf32>,
    %86 = vector.extract_strided_slice %45 {offsets = [0, 8, 0], sizes = [8, 1, 8], strides = [1, 1, 1]} : vector<8x16x8xf32> to vector<8x1x8xf32>
    %87 = vector.shape_cast %86 : vector<8x1x8xf32> to vector<8x8xf32>
    %c0_49 = arith.constant 0 : index
    %c0_50 = arith.constant 0 : index
    %c64 = arith.constant 64 : index
    %88 = vector.load %arg5[%c0_49, %c0_50, %c64] : memref<1x8x128xf32, #tpu.memory_space<vmem>>, vector<1x8x8xf32>
    %89 = vector.shape_cast %88 : vector<1x8x8xf32> to vector<8x8xf32>
    %90 = vector.shape_cast %87 : vector<8x8xf32> to vector<1x8x8xf32>
    tpu.vector_store %arg5[%c0_49, %c0_50, %c64], %90 {strides = array<i32>} : memref<1x8x128xf32, #tpu.memory_space<vmem>>, vector<1x8x8xf32>,
    %91 = vector.extract_strided_slice %45 {offsets = [0, 9, 0], sizes = [8, 1, 8], strides = [1, 1, 1]} : vector<8x16x8xf32> to vector<8x1x8xf32>
    %92 = vector.shape_cast %91 : vector<8x1x8xf32> to vector<8x8xf32>
    %c0_51 = arith.constant 0 : index
    %c0_52 = arith.constant 0 : index
    %c72 = arith.constant 72 : index
    %93 = vector.load %arg5[%c0_51, %c0_52, %c72] : memref<1x8x128xf32, #tpu.memory_space<vmem>>, vector<1x8x8xf32>
    %94 = vector.shape_cast %93 : vector<1x8x8xf32> to vector<8x8xf32>
    %95 = vector.shape_cast %92 : vector<8x8xf32> to vector<1x8x8xf32>
    tpu.vector_store %arg5[%c0_51, %c0_52, %c72], %95 {strides = array<i32>} : memref<1x8x128xf32, #tpu.memory_space<vmem>>, vector<1x8x8xf32>,
    %96 = vector.extract_strided_slice %45 {offsets = [0, 10, 0], sizes = [8, 1, 8], strides = [1, 1, 1]} : vector<8x16x8xf32> to vector<8x1x8xf32>
    %97 = vector.shape_cast %96 : vector<8x1x8xf32> to vector<8x8xf32>
    %c0_53 = arith.constant 0 : index
    %c0_54 = arith.constant 0 : index
    %c80 = arith.constant 80 : index
    %98 = vector.load %arg5[%c0_53, %c0_54, %c80] : memref<1x8x128xf32, #tpu.memory_space<vmem>>, vector<1x8x8xf32>
    %99 = vector.shape_cast %98 : vector<1x8x8xf32> to vector<8x8xf32>
    %100 = vector.shape_cast %97 : vector<8x8xf32> to vector<1x8x8xf32>
    tpu.vector_store %arg5[%c0_53, %c0_54, %c80], %100 {strides = array<i32>} : memref<1x8x128xf32, #tpu.memory_space<vmem>>, vector<1x8x8xf32>,
    %101 = vector.extract_strided_slice %45 {offsets = [0, 11, 0], sizes = [8, 1, 8], strides = [1, 1, 1]} : vector<8x16x8xf32> to vector<8x1x8xf32>
    %102 = vector.shape_cast %101 : vector<8x1x8xf32> to vector<8x8xf32>
    %c0_55 = arith.constant 0 : index
    %c0_56 = arith.constant 0 : index
    %c88 = arith.constant 88 : index
    %103 = vector.load %arg5[%c0_55, %c0_56, %c88] : memref<1x8x128xf32, #tpu.memory_space<vmem>>, vector<1x8x8xf32>
    %104 = vector.shape_cast %103 : vector<1x8x8xf32> to vector<8x8xf32>
    %105 = vector.shape_cast %102 : vector<8x8xf32> to vector<1x8x8xf32>
    tpu.vector_store %arg5[%c0_55, %c0_56, %c88], %105 {strides = array<i32>} : memref<1x8x128xf32, #tpu.memory_space<vmem>>, vector<1x8x8xf32>,
    %106 = vector.extract_strided_slice %45 {offsets = [0, 12, 0], sizes = [8, 1, 8], strides = [1, 1, 1]} : vector<8x16x8xf32> to vector<8x1x8xf32>
    %107 = vector.shape_cast %106 : vector<8x1x8xf32> to vector<8x8xf32>
    %c0_57 = arith.constant 0 : index
    %c0_58 = arith.constant 0 : index
    %c96 = arith.constant 96 : index
    %108 = vector.load %arg5[%c0_57, %c0_58, %c96] : memref<1x8x128xf32, #tpu.memory_space<vmem>>, vector<1x8x8xf32>
    %109 = vector.shape_cast %108 : vector<1x8x8xf32> to vector<8x8xf32>
    %110 = vector.shape_cast %107 : vector<8x8xf32> to vector<1x8x8xf32>
    tpu.vector_store %arg5[%c0_57, %c0_58, %c96], %110 {strides = array<i32>} : memref<1x8x128xf32, #tpu.memory_space<vmem>>, vector<1x8x8xf32>,
    %111 = vector.extract_strided_slice %45 {offsets = [0, 13, 0], sizes = [8, 1, 8], strides = [1, 1, 1]} : vector<8x16x8xf32> to vector<8x1x8xf32>
    %112 = vector.shape_cast %111 : vector<8x1x8xf32> to vector<8x8xf32>
    %c0_59 = arith.constant 0 : index
    %c0_60 = arith.constant 0 : index
    %c104 = arith.constant 104 : index
    %113 = vector.load %arg5[%c0_59, %c0_60, %c104] : memref<1x8x128xf32, #tpu.memory_space<vmem>>, vector<1x8x8xf32>
    %114 = vector.shape_cast %113 : vector<1x8x8xf32> to vector<8x8xf32>
    %115 = vector.shape_cast %112 : vector<8x8xf32> to vector<1x8x8xf32>
    tpu.vector_store %arg5[%c0_59, %c0_60, %c104], %115 {strides = array<i32>} : memref<1x8x128xf32, #tpu.memory_space<vmem>>, vector<1x8x8xf32>,
    %116 = vector.extract_strided_slice %45 {offsets = [0, 14, 0], sizes = [8, 1, 8], strides = [1, 1, 1]} : vector<8x16x8xf32> to vector<8x1x8xf32>
    %117 = vector.shape_cast %116 : vector<8x1x8xf32> to vector<8x8xf32>
    %c0_61 = arith.constant 0 : index
    %c0_62 = arith.constant 0 : index
    %c112 = arith.constant 112 : index
    %118 = vector.load %arg5[%c0_61, %c0_62, %c112] : memref<1x8x128xf32, #tpu.memory_space<vmem>>, vector<1x8x8xf32>
    %119 = vector.shape_cast %118 : vector<1x8x8xf32> to vector<8x8xf32>
    %120 = vector.shape_cast %117 : vector<8x8xf32> to vector<1x8x8xf32>
    tpu.vector_store %arg5[%c0_61, %c0_62, %c112], %120 {strides = array<i32>} : memref<1x8x128xf32, #tpu.memory_space<vmem>>, vector<1x8x8xf32>,
    %121 = vector.extract_strided_slice %45 {offsets = [0, 15, 0], sizes = [8, 1, 8], strides = [1, 1, 1]} : vector<8x16x8xf32> to vector<8x1x8xf32>
    %122 = vector.shape_cast %121 : vector<8x1x8xf32> to vector<8x8xf32>
    %c0_63 = arith.constant 0 : index
    %c0_64 = arith.constant 0 : index
    %c120 = arith.constant 120 : index
    %123 = vector.load %arg5[%c0_63, %c0_64, %c120] : memref<1x8x128xf32, #tpu.memory_space<vmem>>, vector<1x8x8xf32>
    %124 = vector.shape_cast %123 : vector<1x8x8xf32> to vector<8x8xf32>
    %125 = vector.shape_cast %122 : vector<8x8xf32> to vector<1x8x8xf32>
    tpu.vector_store %arg5[%c0_63, %c0_64, %c120], %125 {strides = array<i32>} : memref<1x8x128xf32, #tpu.memory_space<vmem>>, vector<1x8x8xf32>,
    return
  }
  func.func @transform_0(%arg0: i32, %arg1: i32) -> (i32, i32, i32, i32) {
    %c0_i32 = arith.constant 0 : i32
    %c0_i32_0 = arith.constant 0 : i32
    %c0_i32_1 = arith.constant 0 : i32
    %c0_i32_2 = arith.constant 0 : i32
    return %arg0, %c0_i32, %c0_i32_0, %c0_i32_1 : i32, i32, i32, i32
  }
  func.func @transform_1(%arg0: i32, %arg1: i32) -> (i32, i32) {
    %c0_i32 = arith.constant 0 : i32
    %c0_i32_0 = arith.constant 0 : i32
    %c0_i32_1 = arith.constant 0 : i32
    return %c0_i32, %c0_i32_0 : i32, i32
  }
  func.func @transform_2(%arg0: i32, %arg1: i32) -> (i32, i32) {
    %c0_i32 = arith.constant 0 : i32
    %c0_i32_0 = arith.constant 0 : i32
    %c0_i32_1 = arith.constant 0 : i32
    return %c0_i32, %c0_i32_0 : i32, i32
  }
  func.func @transform_3(%arg0: i32, %arg1: i32) -> (i32, i32, i32) {
    %c0_i32 = arith.constant 0 : i32
    %c0_i32_0 = arith.constant 0 : i32
    return %arg0, %arg1, %c0_i32 : i32, i32, i32
  }
  func.func @transform_4(%arg0: i32, %arg1: i32) -> (i32, i32, i32, i32) {
    %c0_i32 = arith.constant 0 : i32
    %c0_i32_0 = arith.constant 0 : i32
    %c0_i32_1 = arith.constant 0 : i32
    return %arg0, %arg1, %c0_i32, %c0_i32_0 : i32, i32, i32, i32
  }
  func.func @transform_5(%arg0: i32, %arg1: i32) -> (i32, i32, i32, i32) {
    %c0_i32 = arith.constant 0 : i32
    %c0_i32_0 = arith.constant 0 : i32
    %c0_i32_1 = arith.constant 0 : i32
    return %arg0, %arg1, %c0_i32, %c0_i32_0 : i32, i32, i32, i32
  }
}

</mosaic_0001>

<llo_original>
// kernel: tpu_custom_call.1
$region0: #{tpu_custom_call.1}
  #allocation0 [shape = 'u32[]', space=smem, size = 0x4, offset = 0x4, fixed_abs, tag = 'smem constant byte address 0x4 - core index']
  #allocation1 [shape = 'u32[144,128]{1,0:T(1,128)}', space=vmem, size = 0x12000, scoped, tag = 'internal scratch']
  #allocation2 [shape = 'f32[128,36]{1,0:T(8,128)}', space=vmem, size = 0x10000, scoped, tag = 'scratch operand']
  %s0 = inlined_call_operand.vmem [shape: f32[2,18,18,4], index: 0, kind: input, shape index: {}]
  %s1 = inlined_call_operand.vmem [shape: f32[36,8], index: 1, kind: input, shape index: {}]
  %s2 = inlined_call_operand.vmem [shape: f32[1,8], index: 2, kind: input, shape index: {}]
  %s3 = inlined_call_operand.hbm [shape: f32[2,16,128], index: 3, kind: output, shape index: {0}]
  %s4 = inlined_call_operand.hbm [shape: f32[2,2,1,8], index: 4, kind: output, shape index: {1}]
  %s5 = inlined_call_operand.hbm [shape: f32[2,2,1,8], index: 5, kind: output, shape index: {2}]
  %6 = xla_tuple %s3, %s4, %s5
  %s7 = sld [smem:[#allocation0]]
  $region61: #{tpu_custom_call.1} parent=0
    _
  %s9 = ssub.s32 1, %s7
  %s10 = scalar_select 0, %s9, %s7
  $region1: #{tpu_custom_call.1} parent=0
    #allocation3 [shape = 'u8[8192]{0}', space=vmem, size = 0x2000, scoped, tag = 'output window, operand 0']
    #allocation4 [shape = 's32[2]{0}', space=sflag, size = 0x8, scoped, tag = 'scoped memory for tpu_custom_call.1']
    #allocation5 [shape = 'u8[1024]{0}', space=vmem, size = 0x400, scoped, tag = 'output window, operand 1']
    #allocation6 [shape = 's32[2]{0}', space=sflag, size = 0x8, scoped, tag = 'scoped memory for tpu_custom_call.1']
    #allocation7 [shape = 'u8[1024]{0}', space=vmem, size = 0x400, scoped, tag = 'output window, operand 2']
    %11 = vsyncpa [#allocation4], 0
    %s12 = scalar_lea.sflag [#allocation4], 1
    %13 = vsyncpa %s12, 0
    %14 = vsyncpa [#allocation6], 0
    %s15 = scalar_lea.sflag [#allocation6], 1
    %16 = vsyncpa %s15, 0
    loop: start=0, step=1, limit=6
    $region2: #{tpu_custom_call.1} parent=1 // loop_pre_header
      _
    $region3: #{tpu_custom_call.1} parent=1 // loop_header
      %s18 = sphi 0, %s22
      %p19 = scmp.ge.s32.totalorder %s18, 6
      %s25 = sphi 0, %s37
      %s26 = sphi 0, %s33
      %s27 = sphi 0, %s25
      %s28 = sphi 0, %s26
      %s29 = sphi 0, %s27
      %s30 = sphi 0, %s28
      %s40 = sphi 0, %s42
      %s43 = sphi 0, %s40
      %s44 = sphi 0, %s43
      %s60 = sphi 0, %s44
      %s64 = sphi 0, %s64
      %s66 = sphi 0, %s64
      %s67 = sphi 0, %s66
      %s81 = sphi 0, %s67
      %s85 = sphi 0, %s85
      %s87 = sphi 0, %s85
      %s88 = sphi 0, %s87
      %s102 = sphi 0, %s88
      %s110 = sphi 0, %s112
      %s113 = sphi 0, %s110
      %s114 = sphi 0, %s113
      %s130 = sphi 0, %s114
      %s138 = sphi 0, %s140
      %s141 = sphi 0, %s138
      %s142 = sphi 0, %s141
      %s158 = sphi 0, %s142
      %s166 = sphi 0, %s168
      %s169 = sphi 0, %s166
      %s170 = sphi 0, %s169
      %s186 = sphi 0, %s170
    $region4: #{tpu_custom_call.1} parent=1 // loop_header_branch
      %21 = sbr.rel (%p19) target = $region8
    $region5: #{tpu_custom_call.1} parent=1 // loop_body
      %s23 = ssub.s32 %s18, 1
      %s24 = ssub.s32 %s18, 2
      %s31 = sadd.s32 1, %s26
      %p32 = scmp.ge.s32.totalorder %s31, 2
      %s33 = scalar_select %p32, 0, %s31
      %s34 = sadd.s32 1, %s25
      %s35 = scalar_select %p32, %s34, %s25
      %p36 = scmp.ge.s32.totalorder %s35, 2
      %s37 = scalar_select %p36, 0, %s35
      %s38 = ssub.s32 %s25, %s37
      %p39 = scmp.eq.s32.totalorder %s38, 0
      %s41 = sadd.s32 %s40, 1
      %s42 = scalar_select %p39, %s40, %s41
      %p45 = pneg %p39
      %p46 = scmp.eq.s32.totalorder %s18, 3
      %p47 = por %p45, %p46
      %p48 = scmp.ne.s32.totalorder %s40, %s43
      %p49 = scmp.eq.s32.totalorder %s18, 0
      %p50 = por %p48, %p49
      %p51 = scmp.ne.s32.totalorder %s40, %s43
      %p52 = scmp.eq.s32.totalorder %s23, 3
      %p53 = por %p51, %p52
      %p54 = scmp.ne.s32.totalorder %s43, %s44
      %p55 = scmp.eq.s32.totalorder %s23, 0
      %p56 = por %p54, %p55
      %p57 = scmp.ne.s32.totalorder %s43, %s44
      %p58 = scmp.eq.s32.totalorder %s24, 3
      %p59 = por %p57, %p58
      %p61 = scmp.ne.s32.totalorder %s44, %s60
      %p62 = scmp.eq.s32.totalorder %s24, 0
      %p63 = por %p61, %p62
      %s65 = sadd.s32 %s64, 1
      %p68 = scmp.eq.s32.totalorder %s18, 3
      %p69 = scmp.ne.s32.totalorder %s64, %s66
      %p70 = scmp.eq.s32.totalorder %s18, 0
      %p71 = por %p69, %p70
      %p72 = scmp.ne.s32.totalorder %s64, %s66
      %p73 = scmp.eq.s32.totalorder %s23, 3
      %p74 = por %p72, %p73
      %p75 = scmp.ne.s32.totalorder %s66, %s67
      %p76 = scmp.eq.s32.totalorder %s23, 0
      %p77 = por %p75, %p76
      %p78 = scmp.ne.s32.totalorder %s66, %s67
      %p79 = scmp.eq.s32.totalorder %s24, 3
      %p80 = por %p78, %p79
      %p82 = scmp.ne.s32.totalorder %s67, %s81
      %p83 = scmp.eq.s32.totalorder %s24, 0
      %p84 = por %p82, %p83
      %s86 = sadd.s32 %s85, 1
      %p89 = scmp.eq.s32.totalorder %s18, 3
      %p90 = scmp.ne.s32.totalorder %s85, %s87
      %p91 = scmp.eq.s32.totalorder %s18, 0
      %p92 = por %p90, %p91
      %p93 = scmp.ne.s32.totalorder %s85, %s87
      %p94 = scmp.eq.s32.totalorder %s23, 3
      %p95 = por %p93, %p94
      %p96 = scmp.ne.s32.totalorder %s87, %s88
      %p97 = scmp.eq.s32.totalorder %s23, 0
      %p98 = por %p96, %p97
      %p99 = scmp.ne.s32.totalorder %s87, %s88
      %p100 = scmp.eq.s32.totalorder %s24, 3
      %p101 = por %p99, %p100
      %p103 = scmp.ne.s32.totalorder %s88, %s102
      %p104 = scmp.eq.s32.totalorder %s24, 0
      %p105 = por %p103, %p104
      %s106 = ssub.s32 %s25, %s37
      %s107 = ssub.s32 %s26, %s33
      %s108 = sor.u32 %s106, %s107
      %p109 = scmp.eq.s32.totalorder %s108, 0
      %s111 = sadd.s32 %s110, 1
      %s112 = scalar_select %p109, %s110, %s111
      %p115 = pneg %p109
      %p116 = scmp.eq.s32.totalorder %s18, 3
      %p117 = por %p115, %p116
      %p118 = scmp.ne.s32.totalorder %s110, %s113
      %p119 = scmp.eq.s32.totalorder %s18, 0
      %p120 = por %p118, %p119
      %p121 = scmp.ne.s32.totalorder %s110, %s113
      %p122 = scmp.eq.s32.totalorder %s23, 3
      %p123 = por %p121, %p122
      %p124 = scmp.ne.s32.totalorder %s113, %s114
      %p125 = scmp.eq.s32.totalorder %s23, 0
      %p126 = por %p124, %p125
      %p127 = scmp.ne.s32.totalorder %s113, %s114
      %p128 = scmp.eq.s32.totalorder %s24, 3
      %p129 = por %p127, %p128
      %p131 = scmp.ne.s32.totalorder %s114, %s130
      %p132 = scmp.eq.s32.totalorder %s24, 0
      %p133 = por %p131, %p132
      %s134 = ssub.s32 %s25, %s37
      %s135 = ssub.s32 %s26, %s33
      %s136 = sor.u32 %s134, %s135
      %p137 = scmp.eq.s32.totalorder %s136, 0
      %s139 = sadd.s32 %s138, 1
      %s140 = scalar_select %p137, %s138, %s139
      %p143 = pneg %p137
      %p144 = scmp.eq.s32.totalorder %s18, 3
      %p145 = por %p143, %p144
      %p146 = scmp.ne.s32.totalorder %s138, %s141
      %p147 = scmp.eq.s32.totalorder %s18, 0
      %p148 = por %p146, %p147
      %p149 = scmp.ne.s32.totalorder %s138, %s141
      %p150 = scmp.eq.s32.totalorder %s23, 3
      %p151 = por %p149, %p150
      %p152 = scmp.ne.s32.totalorder %s141, %s142
      %p153 = scmp.eq.s32.totalorder %s23, 0
      %p154 = por %p152, %p153
      %p155 = scmp.ne.s32.totalorder %s141, %s142
      %p156 = scmp.eq.s32.totalorder %s24, 3
      %p157 = por %p155, %p156
      %p159 = scmp.ne.s32.totalorder %s142, %s158
      %p160 = scmp.eq.s32.totalorder %s24, 0
      %p161 = por %p159, %p160
      %s162 = ssub.s32 %s25, %s37
      %s163 = ssub.s32 %s26, %s33
      %s164 = sor.u32 %s162, %s163
      %p165 = scmp.eq.s32.totalorder %s164, 0
      %s167 = sadd.s32 %s166, 1
      %s168 = scalar_select %p165, %s166, %s167
      %p171 = pneg %p165
      %p172 = scmp.eq.s32.totalorder %s18, 3
      %p173 = por %p171, %p172
      %p174 = scmp.ne.s32.totalorder %s166, %s169
      %p175 = scmp.eq.s32.totalorder %s18, 0
      %p176 = por %p174, %p175
      %p177 = scmp.ne.s32.totalorder %s166, %s169
      %p178 = scmp.eq.s32.totalorder %s23, 3
      %p179 = por %p177, %p178
      %p180 = scmp.ne.s32.totalorder %s169, %s170
      %p181 = scmp.eq.s32.totalorder %s23, 0
      %p182 = por %p180, %p181
      %p183 = scmp.ne.s32.totalorder %s169, %s170
      %p184 = scmp.eq.s32.totalorder %s24, 3
      %p185 = por %p183, %p184
      %p187 = scmp.ne.s32.totalorder %s170, %s186
      %p188 = scmp.eq.s32.totalorder %s24, 0
      %p189 = por %p187, %p188
      %p190 = scmp.le.s32.totalorder 1, %s18
      %p191 = scmp.lt.s32.totalorder %s18, 5
      %p192 = pnand %p190, %p191
      %p193 = pneg %p192
      // Predicated region
      $region9: #{tpu_custom_call.1} parent=5 // pred_check
        _
      $region10: #{tpu_custom_call.1} parent=5 // pred_check_branch
        %195 = sbr.rel (%p192) target = $region12
      $region11: #{tpu_custom_call.1} parent=5 // pred_region
        %s196 = ssub.s32 %s18, 1
        // Predicated region
        $region13: #{tpu_custom_call.1} parent=11 // pred_check
          %p197 = pneg %p77
        $region14: #{tpu_custom_call.1} parent=11 // pred_check_branch
          %199 = sbr.rel (%p197) target = $region16
        $region15: #{tpu_custom_call.1} parent=11 // pred_region
          _
        $region16: #{tpu_custom_call.1} parent=11 // pred_fallthru
          _
        // Predicated region
        $region17: #{tpu_custom_call.1} parent=11 // pred_check
          %p200 = pneg %p98
        $region18: #{tpu_custom_call.1} parent=11 // pred_check_branch
          %202 = sbr.rel (%p200) target = $region20
        $region19: #{tpu_custom_call.1} parent=11 // pred_region
          _
        $region20: #{tpu_custom_call.1} parent=11 // pred_fallthru
          _
      $region12: #{tpu_custom_call.1} parent=5 // pred_fallthru
        _
      %p203 = scmp.lt.s32.totalorder %s18, 4
      // Predicated region
      $region21: #{tpu_custom_call.1} parent=5 // pred_check
        %p204 = pneg %p203
      $region22: #{tpu_custom_call.1} parent=5 // pred_check_branch
        %206 = sbr.rel (%p204) target = $region24
      $region23: #{tpu_custom_call.1} parent=5 // pred_region
        // Predicated region
        $region25: #{tpu_custom_call.1} parent=23 // pred_check
          %p207 = pneg %p50
        $region26: #{tpu_custom_call.1} parent=23 // pred_check_branch
          %209 = sbr.rel (%p207) target = $region28
        $region27: #{tpu_custom_call.1} parent=23 // pred_region
          %p210 = scmp.lt.s32.totalorder %s25, 1
          %s211 = scalar_select %p210, %s25, 1
          %s212 = smul.addr %s211, 54
          %s213 = smul.addr %s212, 8
          %s214 = scalar_lea.vmem %s0, %s213
        $region28: #{tpu_custom_call.1} parent=23 // pred_fallthru
          _
      $region24: #{tpu_custom_call.1} parent=5 // pred_fallthru
        _
      %p215 = scmp.le.s32.totalorder 1, %s18
      %p216 = scmp.lt.s32.totalorder %s18, 5
      %p217 = pnand %p215, %p216
      %p218 = pneg %p217
      // Predicated region
      $region29: #{tpu_custom_call.1} parent=5 // pred_check
        _
      $region30: #{tpu_custom_call.1} parent=5 // pred_check_branch
        %220 = sbr.rel (%p217) target = $region32
      $region31: #{tpu_custom_call.1} parent=5 // pred_region
        %s221 = ssub.s32 %s18, 1
        %p222 = scmp.lt.s32.totalorder %s27, 1
        %s223 = scalar_select %p222, %s27, 1
        %s224 = smul.addr %s223, 54
        %s225 = smul.addr %s224, 8
        %s226 = scalar_lea.vmem %s0, %s225
        %p227 = pneg %p56
        %p228 = pneg %p53
        %p229 = pneg %p77
        %p230 = pneg %p74
        %p231 = pneg %p98
        %p232 = pneg %p95
        %p233 = pneg %p126
        %p234 = pneg %p123
        %s235 = sand.u32 %s113, 1
        %s236 = scalar_lea.sflag [#allocation4], %s235
        %s237 = sand.u32 %s113, 1
        %s238 = smul.addr %s237, 8
        %s239 = scalar_lea.vmem [#allocation3], %s238
        %p240 = pneg %p154
        %p241 = pneg %p151
        %s242 = sand.u32 %s23, 1
        %s243 = scalar_lea.sflag [#allocation6], %s242
        %s244 = sand.u32 %s141, 1
        %s245 = scalar_lea.vmem [#allocation5], %s244
        %p246 = pneg %p182
        %p247 = pneg %p179
        %s248 = sand.u32 %s23, 1
        %s249 = scalar_lea.sflag [#allocation6], %s248
        %s250 = sand.u32 %s169, 1
        %s251 = scalar_lea.vmem [#allocation7], %s250
        %p252 = scmp.lt.s32.totalorder %s27, 1
        %s253 = scalar_select %p252, %s27, 1
        %s254 = smul.addr %s253, 54
        %s255 = smul.addr %s254, 8
        %s256 = scalar_lea.vmem %s0, %s255
        %s257 = smul.u32 %s28, 8
        %s258 = smul.u32 %s257, 24
        %s259 = scalar_lea.vmem %s256, %s258
        %v260 = vld [vmem:[%s259] sm:$0xff]
        %v261 = vld [vmem:[%s259 + $0x8] sm:$0xff]
        %v262 = vld [vmem:[%s259 + $0x10] sm:$0x3]
        %v263 = vld [vmem:[%s259 + $0x18] sm:$0xff]
        %v264 = vld [vmem:[%s259 + $0x20] sm:$0xff]
        %v265 = vld [vmem:[%s259 + $0x28] sm:$0x3]
        %v266 = vld [vmem:[%s259 + $0x30] sm:$0xff]
        %v267 = vld [vmem:[%s259 + $0x38] sm:$0xff]
        %v268 = vld [vmem:[%s259 + $0x40] sm:$0x3]
        %v269 = vld [vmem:[%s259 + $0x48] sm:$0xff]
        %v270 = vld [vmem:[%s259 + $0x50] sm:$0xff]
        %v271 = vld [vmem:[%s259 + $0x58] sm:$0x3]
        %v272 = vld [vmem:[%s259 + $0x60] sm:$0xff]
        %v273 = vld [vmem:[%s259 + $0x68] sm:$0xff]
        %v274 = vld [vmem:[%s259 + $0x70] sm:$0x3]
        %v275 = vld [vmem:[%s259 + $0x78] sm:$0xff]
        %v276 = vld [vmem:[%s259 + $0x80] sm:$0xff]
        %v277 = vld [vmem:[%s259 + $0x88] sm:$0x3]
        %v278 = vld [vmem:[%s259 + $0x90] sm:$0xff]
        %v279 = vld [vmem:[%s259 + $0x98] sm:$0xff]
        %v280 = vld [vmem:[%s259 + $0xa0] sm:$0x3]
        %v281 = vld [vmem:[%s259 + $0xa8] sm:$0xff]
        %v282 = vld [vmem:[%s259 + $0xb0] sm:$0xff]
        %v283 = vld [vmem:[%s259 + $0xb8] sm:$0x3]
        %v284 = vld [vmem:[%s259 + $0xc0] sm:$0xff]
        %v285 = vld [vmem:[%s259 + $0xc8] sm:$0xff]
        %v286 = vld [vmem:[%s259 + $0xd0] sm:$0x3]
        %v287 = vld [vmem:[%s259 + $0xd8] sm:$0xff]
        %v288 = vld [vmem:[%s259 + $0xe0] sm:$0xff]
        %v289 = vld [vmem:[%s259 + $0xe8] sm:$0x3]
        %vm290 = vcmask 31744
        %291 = vst.msk [vmem:[#allocation2] sm:$0xff] %vm290, %v260
        %292 = vst.msk [vmem:[#allocation2 + $0x8] sm:$0xff] %vm290, %v261
        %293 = vst.msk [vmem:[#allocation2 + $0x10] sm:$0xff] %vm290, %v263
        %294 = vst.msk [vmem:[#allocation2 + $0x18] sm:$0xff] %vm290, %v264
        %295 = vst.msk [vmem:[#allocation2 + $0x20] sm:$0xff] %vm290, %v266
        %296 = vst.msk [vmem:[#allocation2 + $0x28] sm:$0xff] %vm290, %v267
        %297 = vst.msk [vmem:[#allocation2 + $0x30] sm:$0xff] %vm290, %v269
        %298 = vst.msk [vmem:[#allocation2 + $0x38] sm:$0xff] %vm290, %v270
        %299 = vst.msk [vmem:[#allocation2 + $0x40] sm:$0xff] %vm290, %v272
        %300 = vst.msk [vmem:[#allocation2 + $0x48] sm:$0xff] %vm290, %v273
        %301 = vst.msk [vmem:[#allocation2 + $0x50] sm:$0xff] %vm290, %v275
        %302 = vst.msk [vmem:[#allocation2 + $0x58] sm:$0xff] %vm290, %v276
        %303 = vst.msk [vmem:[#allocation2 + $0x60] sm:$0xff] %vm290, %v278
        %304 = vst.msk [vmem:[#allocation2 + $0x68] sm:$0xff] %vm290, %v279
        %305 = vst.msk [vmem:[#allocation2 + $0x70] sm:$0xff] %vm290, %v281
        %306 = vst.msk [vmem:[#allocation2 + $0x78] sm:$0xff] %vm290, %v282
        %vm331 = vcmask 1046528
        %v332 = vrot.slane %v260, 1
        %v333 = vrot.slane %v261, 1
        %v334 = vsel %vm331, %v332, %v333
        %v335 = vrot.slane %v262, 1
        %v336 = vsel %vm331, %v333, %v335
        %v337 = vrot.slane %v263, 1
        %v338 = vrot.slane %v264, 1
        %v339 = vsel %vm331, %v337, %v338
        %v340 = vrot.slane %v265, 1
        %v341 = vsel %vm331, %v338, %v340
        %v342 = vrot.slane %v266, 1
        %v343 = vrot.slane %v267, 1
        %v344 = vsel %vm331, %v342, %v343
        %v345 = vrot.slane %v268, 1
        %v346 = vsel %vm331, %v343, %v345
        %v347 = vrot.slane %v269, 1
        %v348 = vrot.slane %v270, 1
        %v349 = vsel %vm331, %v347, %v348
        %v350 = vrot.slane %v271, 1
        %v351 = vsel %vm331, %v348, %v350
        %v352 = vrot.slane %v272, 1
        %v353 = vrot.slane %v273, 1
        %v354 = vsel %vm331, %v352, %v353
        %v355 = vrot.slane %v274, 1
        %v356 = vsel %vm331, %v353, %v355
        %v357 = vrot.slane %v275, 1
        %v358 = vrot.slane %v276, 1
        %v359 = vsel %vm331, %v357, %v358
        %v360 = vrot.slane %v277, 1
        %v361 = vsel %vm331, %v358, %v360
        %v362 = vrot.slane %v278, 1
        %v363 = vrot.slane %v279, 1
        %v364 = vsel %vm331, %v362, %v363
        %v365 = vrot.slane %v280, 1
        %v366 = vsel %vm331, %v363, %v365
        %v367 = vrot.slane %v281, 1
        %v368 = vrot.slane %v282, 1
        %v369 = vsel %vm331, %v367, %v368
        %v370 = vrot.slane %v283, 1
        %v371 = vsel %vm331, %v368, %v370
        %372 = vrot.lane.b32.xlu0 %v334, 4
        %v373 = vpop.permute.xlu0 %372
        %374 = vrot.lane.b32.xlu0 %v336, 4
        %v375 = vpop.permute.xlu0 %374
        %376 = vrot.lane.b32.xlu0 %v339, 4
        %v377 = vpop.permute.xlu0 %376
        %378 = vrot.lane.b32.xlu0 %v341, 4
        %v379 = vpop.permute.xlu0 %378
        %380 = vrot.lane.b32.xlu0 %v344, 4
        %v381 = vpop.permute.xlu0 %380
        %382 = vrot.lane.b32.xlu0 %v346, 4
        %v383 = vpop.permute.xlu0 %382
        %384 = vrot.lane.b32.xlu0 %v349, 4
        %v385 = vpop.permute.xlu0 %384
        %386 = vrot.lane.b32.xlu0 %v351, 4
        %v387 = vpop.permute.xlu0 %386
        %388 = vrot.lane.b32.xlu0 %v354, 4
        %v389 = vpop.permute.xlu0 %388
        %390 = vrot.lane.b32.xlu0 %v356, 4
        %v391 = vpop.permute.xlu0 %390
        %392 = vrot.lane.b32.xlu0 %v359, 4
        %v393 = vpop.permute.xlu0 %392
        %394 = vrot.lane.b32.xlu0 %v361, 4
        %v395 = vpop.permute.xlu0 %394
        %396 = vrot.lane.b32.xlu0 %v364, 4
        %v397 = vpop.permute.xlu0 %396
        %398 = vrot.lane.b32.xlu0 %v366, 4
        %v399 = vpop.permute.xlu0 %398
        %400 = vrot.lane.b32.xlu0 %v369, 4
        %v401 = vpop.permute.xlu0 %400
        %402 = vrot.lane.b32.xlu0 %v371, 4
        %v403 = vpop.permute.xlu0 %402
        %vm420 = vcmask 64544
        %421 = vst.msk [vmem:[#allocation2] sm:$0xff] %vm420, %v373
        %422 = vst.msk [vmem:[#allocation2 + $0x8] sm:$0xff] %vm420, %v375
        %423 = vst.msk [vmem:[#allocation2 + $0x10] sm:$0xff] %vm420, %v377
        %424 = vst.msk [vmem:[#allocation2 + $0x18] sm:$0xff] %vm420, %v379
        %425 = vst.msk [vmem:[#allocation2 + $0x20] sm:$0xff] %vm420, %v381
        %426 = vst.msk [vmem:[#allocation2 + $0x28] sm:$0xff] %vm420, %v383
        %427 = vst.msk [vmem:[#allocation2 + $0x30] sm:$0xff] %vm420, %v385
        %428 = vst.msk [vmem:[#allocation2 + $0x38] sm:$0xff] %vm420, %v387
        %429 = vst.msk [vmem:[#allocation2 + $0x40] sm:$0xff] %vm420, %v389
        %430 = vst.msk [vmem:[#allocation2 + $0x48] sm:$0xff] %vm420, %v391
        %431 = vst.msk [vmem:[#allocation2 + $0x50] sm:$0xff] %vm420, %v393
        %432 = vst.msk [vmem:[#allocation2 + $0x58] sm:$0xff] %vm420, %v395
        %433 = vst.msk [vmem:[#allocation2 + $0x60] sm:$0xff] %vm420, %v397
        %434 = vst.msk [vmem:[#allocation2 + $0x68] sm:$0xff] %vm420, %v399
        %435 = vst.msk [vmem:[#allocation2 + $0x70] sm:$0xff] %vm420, %v401
        %436 = vst.msk [vmem:[#allocation2 + $0x78] sm:$0xff] %vm420, %v403
        %vm437 = vcmask 1045504
        %v438 = vrot.slane %v260, 2
        %v439 = vrot.slane %v261, 2
        %v440 = vsel %vm437, %v438, %v439
        %v441 = vrot.slane %v262, 2
        %v442 = vsel %vm437, %v439, %v441
        %v443 = vrot.slane %v263, 2
        %v444 = vrot.slane %v264, 2
        %v445 = vsel %vm437, %v443, %v444
        %v446 = vrot.slane %v265, 2
        %v447 = vsel %vm437, %v444, %v446
        %v448 = vrot.slane %v266, 2
        %v449 = vrot.slane %v267, 2
        %v450 = vsel %vm437, %v448, %v449
        %v451 = vrot.slane %v268, 2
        %v452 = vsel %vm437, %v449, %v451
        %v453 = vrot.slane %v269, 2
        %v454 = vrot.slane %v270, 2
        %v455 = vsel %vm437, %v453, %v454
        %v456 = vrot.slane %v271, 2
        %v457 = vsel %vm437, %v454, %v456
        %v458 = vrot.slane %v272, 2
        %v459 = vrot.slane %v273, 2
        %v460 = vsel %vm437, %v458, %v459
        %v461 = vrot.slane %v274, 2
        %v462 = vsel %vm437, %v459, %v461
        %v463 = vrot.slane %v275, 2
        %v464 = vrot.slane %v276, 2
        %v465 = vsel %vm437, %v463, %v464
        %v466 = vrot.slane %v277, 2
        %v467 = vsel %vm437, %v464, %v466
        %v468 = vrot.slane %v278, 2
        %v469 = vrot.slane %v279, 2
        %v470 = vsel %vm437, %v468, %v469
        %v471 = vrot.slane %v280, 2
        %v472 = vsel %vm437, %v469, %v471
        %v473 = vrot.slane %v281, 2
        %v474 = vrot.slane %v282, 2
        %v475 = vsel %vm437, %v473, %v474
        %v476 = vrot.slane %v283, 2
        %v477 = vsel %vm437, %v474, %v476
        %478 = vrot.lane.b32.xlu0 %v440, 8
        %v479 = vpop.permute.xlu0 %478
        %480 = vrot.lane.b32.xlu0 %v442, 8
        %v481 = vpop.permute.xlu0 %480
        %482 = vrot.lane.b32.xlu0 %v445, 8
        %v483 = vpop.permute.xlu0 %482
        %484 = vrot.lane.b32.xlu0 %v447, 8
        %v485 = vpop.permute.xlu0 %484
        %486 = vrot.lane.b32.xlu0 %v450, 8
        %v487 = vpop.permute.xlu0 %486
        %488 = vrot.lane.b32.xlu0 %v452, 8
        %v489 = vpop.permute.xlu0 %488
        %490 = vrot.lane.b32.xlu0 %v455, 8
        %v491 = vpop.permute.xlu0 %490
        %492 = vrot.lane.b32.xlu0 %v457, 8
        %v493 = vpop.permute.xlu0 %492
        %494 = vrot.lane.b32.xlu0 %v460, 8
        %v495 = vpop.permute.xlu0 %494
        %496 = vrot.lane.b32.xlu0 %v462, 8
        %v497 = vpop.permute.xlu0 %496
        %498 = vrot.lane.b32.xlu0 %v465, 8
        %v499 = vpop.permute.xlu0 %498
        %500 = vrot.lane.b32.xlu0 %v467, 8
        %v501 = vpop.permute.xlu0 %500
        %502 = vrot.lane.b32.xlu0 %v470, 8
        %v503 = vpop.permute.xlu0 %502
        %504 = vrot.lane.b32.xlu0 %v472, 8
        %v505 = vpop.permute.xlu0 %504
        %506 = vrot.lane.b32.xlu0 %v475, 8
        %v507 = vpop.permute.xlu0 %506
        %508 = vrot.lane.b32.xlu0 %v477, 8
        %v509 = vpop.permute.xlu0 %508
        %vm526 = vcmask 97344
        %527 = vst.msk [vmem:[#allocation2] sm:$0xff] %vm526, %v479
        %528 = vst.msk [vmem:[#allocation2 + $0x8] sm:$0xff] %vm526, %v481
        %529 = vst.msk [vmem:[#allocation2 + $0x10] sm:$0xff] %vm526, %v483
        %530 = vst.msk [vmem:[#allocation2 + $0x18] sm:$0xff] %vm526, %v485
        %531 = vst.msk [vmem:[#allocation2 + $0x20] sm:$0xff] %vm526, %v487
        %532 = vst.msk [vmem:[#allocation2 + $0x28] sm:$0xff] %vm526, %v489
        %533 = vst.msk [vmem:[#allocation2 + $0x30] sm:$0xff] %vm526, %v491
        %534 = vst.msk [vmem:[#allocation2 + $0x38] sm:$0xff] %vm526, %v493
        %535 = vst.msk [vmem:[#allocation2 + $0x40] sm:$0xff] %vm526, %v495
        %536 = vst.msk [vmem:[#allocation2 + $0x48] sm:$0xff] %vm526, %v497
        %537 = vst.msk [vmem:[#allocation2 + $0x50] sm:$0xff] %vm526, %v499
        %538 = vst.msk [vmem:[#allocation2 + $0x58] sm:$0xff] %vm526, %v501
        %539 = vst.msk [vmem:[#allocation2 + $0x60] sm:$0xff] %vm526, %v503
        %540 = vst.msk [vmem:[#allocation2 + $0x68] sm:$0xff] %vm526, %v505
        %541 = vst.msk [vmem:[#allocation2 + $0x70] sm:$0xff] %vm526, %v507
        %542 = vst.msk [vmem:[#allocation2 + $0x78] sm:$0xff] %vm526, %v509
        %545 = vrot.lane.b32.xlu0 %v263, 12
        %v546 = vpop.permute.xlu0 %545
        %547 = vrot.lane.b32.xlu0 %v264, 12
        %v548 = vpop.permute.xlu0 %547
        %549 = vrot.lane.b32.xlu0 %v266, 12
        %v550 = vpop.permute.xlu0 %549
        %551 = vrot.lane.b32.xlu0 %v267, 12
        %v552 = vpop.permute.xlu0 %551
        %553 = vrot.lane.b32.xlu0 %v269, 12
        %v554 = vpop.permute.xlu0 %553
        %555 = vrot.lane.b32.xlu0 %v270, 12
        %v556 = vpop.permute.xlu0 %555
        %557 = vrot.lane.b32.xlu0 %v272, 12
        %v558 = vpop.permute.xlu0 %557
        %559 = vrot.lane.b32.xlu0 %v273, 12
        %v560 = vpop.permute.xlu0 %559
        %561 = vrot.lane.b32.xlu0 %v275, 12
        %v562 = vpop.permute.xlu0 %561
        %563 = vrot.lane.b32.xlu0 %v276, 12
        %v564 = vpop.permute.xlu0 %563
        %565 = vrot.lane.b32.xlu0 %v278, 12
        %v566 = vpop.permute.xlu0 %565
        %567 = vrot.lane.b32.xlu0 %v279, 12
        %v568 = vpop.permute.xlu0 %567
        %569 = vrot.lane.b32.xlu0 %v281, 12
        %v570 = vpop.permute.xlu0 %569
        %571 = vrot.lane.b32.xlu0 %v282, 12
        %v572 = vpop.permute.xlu0 %571
        %573 = vrot.lane.b32.xlu0 %v284, 12
        %v574 = vpop.permute.xlu0 %573
        %575 = vrot.lane.b32.xlu0 %v285, 12
        %v576 = vpop.permute.xlu0 %575
        %vm593 = vcmask 130144
        %594 = vst.msk [vmem:[#allocation2] sm:$0xff] %vm593, %v546
        %595 = vst.msk [vmem:[#allocation2 + $0x8] sm:$0xff] %vm593, %v548
        %596 = vst.msk [vmem:[#allocation2 + $0x10] sm:$0xff] %vm593, %v550
        %597 = vst.msk [vmem:[#allocation2 + $0x18] sm:$0xff] %vm593, %v552
        %598 = vst.msk [vmem:[#allocation2 + $0x20] sm:$0xff] %vm593, %v554
        %599 = vst.msk [vmem:[#allocation2 + $0x28] sm:$0xff] %vm593, %v556
        %600 = vst.msk [vmem:[#allocation2 + $0x30] sm:$0xff] %vm593, %v558
        %601 = vst.msk [vmem:[#allocation2 + $0x38] sm:$0xff] %vm593, %v560
        %602 = vst.msk [vmem:[#allocation2 + $0x40] sm:$0xff] %vm593, %v562
        %603 = vst.msk [vmem:[#allocation2 + $0x48] sm:$0xff] %vm593, %v564
        %604 = vst.msk [vmem:[#allocation2 + $0x50] sm:$0xff] %vm593, %v566
        %605 = vst.msk [vmem:[#allocation2 + $0x58] sm:$0xff] %vm593, %v568
        %606 = vst.msk [vmem:[#allocation2 + $0x60] sm:$0xff] %vm593, %v570
        %607 = vst.msk [vmem:[#allocation2 + $0x68] sm:$0xff] %vm593, %v572
        %608 = vst.msk [vmem:[#allocation2 + $0x70] sm:$0xff] %vm593, %v574
        %609 = vst.msk [vmem:[#allocation2 + $0x78] sm:$0xff] %vm593, %v576
        %v611 = vrot.slane %v284, 1
        %v612 = vrot.slane %v285, 1
        %v613 = vsel %vm331, %v611, %v612
        %v614 = vrot.slane %v286, 1
        %v615 = vsel %vm331, %v612, %v614
        %616 = vrot.lane.b32.xlu0 %v339, 16
        %v617 = vpop.permute.xlu0 %616
        %618 = vrot.lane.b32.xlu0 %v341, 16
        %v619 = vpop.permute.xlu0 %618
        %620 = vrot.lane.b32.xlu0 %v344, 16
        %v621 = vpop.permute.xlu0 %620
        %622 = vrot.lane.b32.xlu0 %v346, 16
        %v623 = vpop.permute.xlu0 %622
        %624 = vrot.lane.b32.xlu0 %v349, 16
        %v625 = vpop.permute.xlu0 %624
        %626 = vrot.lane.b32.xlu0 %v351, 16
        %v627 = vpop.permute.xlu0 %626
        %628 = vrot.lane.b32.xlu0 %v354, 16
        %v629 = vpop.permute.xlu0 %628
        %630 = vrot.lane.b32.xlu0 %v356, 16
        %v631 = vpop.permute.xlu0 %630
        %632 = vrot.lane.b32.xlu0 %v359, 16
        %v633 = vpop.permute.xlu0 %632
        %634 = vrot.lane.b32.xlu0 %v361, 16
        %v635 = vpop.permute.xlu0 %634
        %636 = vrot.lane.b32.xlu0 %v364, 16
        %v637 = vpop.permute.xlu0 %636
        %638 = vrot.lane.b32.xlu0 %v366, 16
        %v639 = vpop.permute.xlu0 %638
        %640 = vrot.lane.b32.xlu0 %v369, 16
        %v641 = vpop.permute.xlu0 %640
        %642 = vrot.lane.b32.xlu0 %v371, 16
        %v643 = vpop.permute.xlu0 %642
        %644 = vrot.lane.b32.xlu0 %v613, 16
        %v645 = vpop.permute.xlu0 %644
        %646 = vrot.lane.b32.xlu0 %v615, 16
        %v647 = vpop.permute.xlu0 %646
        %vm664 = vcmask 162944
        %665 = vst.msk [vmem:[#allocation2] sm:$0xff] %vm664, %v617
        %666 = vst.msk [vmem:[#allocation2 + $0x8] sm:$0xff] %vm664, %v619
        %667 = vst.msk [vmem:[#allocation2 + $0x10] sm:$0xff] %vm664, %v621
        %668 = vst.msk [vmem:[#allocation2 + $0x18] sm:$0xff] %vm664, %v623
        %669 = vst.msk [vmem:[#allocation2 + $0x20] sm:$0xff] %vm664, %v625
        %670 = vst.msk [vmem:[#allocation2 + $0x28] sm:$0xff] %vm664, %v627
        %671 = vst.msk [vmem:[#allocation2 + $0x30] sm:$0xff] %vm664, %v629
        %672 = vst.msk [vmem:[#allocation2 + $0x38] sm:$0xff] %vm664, %v631
        %673 = vst.msk [vmem:[#allocation2 + $0x40] sm:$0xff] %vm664, %v633
        %674 = vst.msk [vmem:[#allocation2 + $0x48] sm:$0xff] %vm664, %v635
        %675 = vst.msk [vmem:[#allocation2 + $0x50] sm:$0xff] %vm664, %v637
        %676 = vst.msk [vmem:[#allocation2 + $0x58] sm:$0xff] %vm664, %v639
        %677 = vst.msk [vmem:[#allocation2 + $0x60] sm:$0xff] %vm664, %v641
        %678 = vst.msk [vmem:[#allocation2 + $0x68] sm:$0xff] %vm664, %v643
        %679 = vst.msk [vmem:[#allocation2 + $0x70] sm:$0xff] %vm664, %v645
        %680 = vst.msk [vmem:[#allocation2 + $0x78] sm:$0xff] %vm664, %v647
        %v681 = vrot.slane %v284, 2
        %v682 = vrot.slane %v285, 2
        %v683 = vsel %vm437, %v681, %v682
        %v684 = vrot.slane %v286, 2
        %v685 = vsel %vm437, %v682, %v684
        %686 = vrot.lane.b32.xlu0 %v445, 20
        %v687 = vpop.permute.xlu0 %686
        %688 = vrot.lane.b32.xlu0 %v447, 20
        %v689 = vpop.permute.xlu0 %688
        %690 = vrot.lane.b32.xlu0 %v450, 20
        %v691 = vpop.permute.xlu0 %690
        %692 = vrot.lane.b32.xlu0 %v452, 20
        %v693 = vpop.permute.xlu0 %692
        %694 = vrot.lane.b32.xlu0 %v455, 20
        %v695 = vpop.permute.xlu0 %694
        %696 = vrot.lane.b32.xlu0 %v457, 20
        %v697 = vpop.permute.xlu0 %696
        %698 = vrot.lane.b32.xlu0 %v460, 20
        %v699 = vpop.permute.xlu0 %698
        %700 = vrot.lane.b32.xlu0 %v462, 20
        %v701 = vpop.permute.xlu0 %700
        %702 = vrot.lane.b32.xlu0 %v465, 20
        %v703 = vpop.permute.xlu0 %702
        %704 = vrot.lane.b32.xlu0 %v467, 20
        %v705 = vpop.permute.xlu0 %704
        %706 = vrot.lane.b32.xlu0 %v470, 20
        %v707 = vpop.permute.xlu0 %706
        %708 = vrot.lane.b32.xlu0 %v472, 20
        %v709 = vpop.permute.xlu0 %708
        %710 = vrot.lane.b32.xlu0 %v475, 20
        %v711 = vpop.permute.xlu0 %710
        %712 = vrot.lane.b32.xlu0 %v477, 20
        %v713 = vpop.permute.xlu0 %712
        %714 = vrot.lane.b32.xlu0 %v683, 20
        %v715 = vpop.permute.xlu0 %714
        %716 = vrot.lane.b32.xlu0 %v685, 20
        %v717 = vpop.permute.xlu0 %716
        %vm734 = vcmask 195744
        %735 = vst.msk [vmem:[#allocation2] sm:$0xff] %vm734, %v687
        %736 = vst.msk [vmem:[#allocation2 + $0x8] sm:$0xff] %vm734, %v689
        %737 = vst.msk [vmem:[#allocation2 + $0x10] sm:$0xff] %vm734, %v691
        %738 = vst.msk [vmem:[#allocation2 + $0x18] sm:$0xff] %vm734, %v693
        %739 = vst.msk [vmem:[#allocation2 + $0x20] sm:$0xff] %vm734, %v695
        %740 = vst.msk [vmem:[#allocation2 + $0x28] sm:$0xff] %vm734, %v697
        %741 = vst.msk [vmem:[#allocation2 + $0x30] sm:$0xff] %vm734, %v699
        %742 = vst.msk [vmem:[#allocation2 + $0x38] sm:$0xff] %vm734, %v701
        %743 = vst.msk [vmem:[#allocation2 + $0x40] sm:$0xff] %vm734, %v703
        %744 = vst.msk [vmem:[#allocation2 + $0x48] sm:$0xff] %vm734, %v705
        %745 = vst.msk [vmem:[#allocation2 + $0x50] sm:$0xff] %vm734, %v707
        %746 = vst.msk [vmem:[#allocation2 + $0x58] sm:$0xff] %vm734, %v709
        %747 = vst.msk [vmem:[#allocation2 + $0x60] sm:$0xff] %vm734, %v711
        %748 = vst.msk [vmem:[#allocation2 + $0x68] sm:$0xff] %vm734, %v713
        %749 = vst.msk [vmem:[#allocation2 + $0x70] sm:$0xff] %vm734, %v715
        %750 = vst.msk [vmem:[#allocation2 + $0x78] sm:$0xff] %vm734, %v717
        %753 = vrot.lane.b32.xlu0 %v266, 24
        %v754 = vpop.permute.xlu0 %753
        %755 = vrot.lane.b32.xlu0 %v267, 24
        %v756 = vpop.permute.xlu0 %755
        %757 = vrot.lane.b32.xlu0 %v269, 24
        %v758 = vpop.permute.xlu0 %757
        %759 = vrot.lane.b32.xlu0 %v270, 24
        %v760 = vpop.permute.xlu0 %759
        %761 = vrot.lane.b32.xlu0 %v272, 24
        %v762 = vpop.permute.xlu0 %761
        %763 = vrot.lane.b32.xlu0 %v273, 24
        %v764 = vpop.permute.xlu0 %763
        %765 = vrot.lane.b32.xlu0 %v275, 24
        %v766 = vpop.permute.xlu0 %765
        %767 = vrot.lane.b32.xlu0 %v276, 24
        %v768 = vpop.permute.xlu0 %767
        %769 = vrot.lane.b32.xlu0 %v278, 24
        %v770 = vpop.permute.xlu0 %769
        %771 = vrot.lane.b32.xlu0 %v279, 24
        %v772 = vpop.permute.xlu0 %771
        %773 = vrot.lane.b32.xlu0 %v281, 24
        %v774 = vpop.permute.xlu0 %773
        %775 = vrot.lane.b32.xlu0 %v282, 24
        %v776 = vpop.permute.xlu0 %775
        %777 = vrot.lane.b32.xlu0 %v284, 24
        %v778 = vpop.permute.xlu0 %777
        %779 = vrot.lane.b32.xlu0 %v285, 24
        %v780 = vpop.permute.xlu0 %779
        %781 = vrot.lane.b32.xlu0 %v287, 24
        %v782 = vpop.permute.xlu0 %781
        %783 = vrot.lane.b32.xlu0 %v288, 24
        %v784 = vpop.permute.xlu0 %783
        %vm801 = vcmask 228544
        %802 = vst.msk [vmem:[#allocation2] sm:$0xff] %vm801, %v754
        %803 = vst.msk [vmem:[#allocation2 + $0x8] sm:$0xff] %vm801, %v756
        %804 = vst.msk [vmem:[#allocation2 + $0x10] sm:$0xff] %vm801, %v758
        %805 = vst.msk [vmem:[#allocation2 + $0x18] sm:$0xff] %vm801, %v760
        %806 = vst.msk [vmem:[#allocation2 + $0x20] sm:$0xff] %vm801, %v762
        %807 = vst.msk [vmem:[#allocation2 + $0x28] sm:$0xff] %vm801, %v764
        %808 = vst.msk [vmem:[#allocation2 + $0x30] sm:$0xff] %vm801, %v766
        %809 = vst.msk [vmem:[#allocation2 + $0x38] sm:$0xff] %vm801, %v768
        %810 = vst.msk [vmem:[#allocation2 + $0x40] sm:$0xff] %vm801, %v770
        %811 = vst.msk [vmem:[#allocation2 + $0x48] sm:$0xff] %vm801, %v772
        %812 = vst.msk [vmem:[#allocation2 + $0x50] sm:$0xff] %vm801, %v774
        %813 = vst.msk [vmem:[#allocation2 + $0x58] sm:$0xff] %vm801, %v776
        %814 = vst.msk [vmem:[#allocation2 + $0x60] sm:$0xff] %vm801, %v778
        %815 = vst.msk [vmem:[#allocation2 + $0x68] sm:$0xff] %vm801, %v780
        %816 = vst.msk [vmem:[#allocation2 + $0x70] sm:$0xff] %vm801, %v782
        %817 = vst.msk [vmem:[#allocation2 + $0x78] sm:$0xff] %vm801, %v784
        %v819 = vrot.slane %v287, 1
        %v820 = vrot.slane %v288, 1
        %v821 = vsel %vm331, %v819, %v820
        %v822 = vrot.slane %v289, 1
        %v823 = vsel %vm331, %v820, %v822
        %824 = vrot.lane.b32.xlu0 %v344, 28
        %v825 = vpop.permute.xlu0 %824
        %826 = vrot.lane.b32.xlu0 %v346, 28
        %v827 = vpop.permute.xlu0 %826
        %828 = vrot.lane.b32.xlu0 %v349, 28
        %v829 = vpop.permute.xlu0 %828
        %830 = vrot.lane.b32.xlu0 %v351, 28
        %v831 = vpop.permute.xlu0 %830
        %832 = vrot.lane.b32.xlu0 %v354, 28
        %v833 = vpop.permute.xlu0 %832
        %834 = vrot.lane.b32.xlu0 %v356, 28
        %v835 = vpop.permute.xlu0 %834
        %836 = vrot.lane.b32.xlu0 %v359, 28
        %v837 = vpop.permute.xlu0 %836
        %838 = vrot.lane.b32.xlu0 %v361, 28
        %v839 = vpop.permute.xlu0 %838
        %840 = vrot.lane.b32.xlu0 %v364, 28
        %v841 = vpop.permute.xlu0 %840
        %842 = vrot.lane.b32.xlu0 %v366, 28
        %v843 = vpop.permute.xlu0 %842
        %844 = vrot.lane.b32.xlu0 %v369, 28
        %v845 = vpop.permute.xlu0 %844
        %846 = vrot.lane.b32.xlu0 %v371, 28
        %v847 = vpop.permute.xlu0 %846
        %848 = vrot.lane.b32.xlu0 %v613, 28
        %v849 = vpop.permute.xlu0 %848
        %850 = vrot.lane.b32.xlu0 %v615, 28
        %v851 = vpop.permute.xlu0 %850
        %852 = vrot.lane.b32.xlu0 %v821, 28
        %v853 = vpop.permute.xlu0 %852
        %854 = vrot.lane.b32.xlu0 %v823, 28
        %v855 = vpop.permute.xlu0 %854
        %vm872 = vcmask 261344
        %873 = vst.msk [vmem:[#allocation2] sm:$0xff] %vm872, %v825
        %874 = vst.msk [vmem:[#allocation2 + $0x8] sm:$0xff] %vm872, %v827
        %875 = vst.msk [vmem:[#allocation2 + $0x10] sm:$0xff] %vm872, %v829
        %876 = vst.msk [vmem:[#allocation2 + $0x18] sm:$0xff] %vm872, %v831
        %877 = vst.msk [vmem:[#allocation2 + $0x20] sm:$0xff] %vm872, %v833
        %878 = vst.msk [vmem:[#allocation2 + $0x28] sm:$0xff] %vm872, %v835
        %879 = vst.msk [vmem:[#allocation2 + $0x30] sm:$0xff] %vm872, %v837
        %880 = vst.msk [vmem:[#allocation2 + $0x38] sm:$0xff] %vm872, %v839
        %881 = vst.msk [vmem:[#allocation2 + $0x40] sm:$0xff] %vm872, %v841
        %882 = vst.msk [vmem:[#allocation2 + $0x48] sm:$0xff] %vm872, %v843
        %883 = vst.msk [vmem:[#allocation2 + $0x50] sm:$0xff] %vm872, %v845
        %884 = vst.msk [vmem:[#allocation2 + $0x58] sm:$0xff] %vm872, %v847
        %885 = vst.msk [vmem:[#allocation2 + $0x60] sm:$0xff] %vm872, %v849
        %886 = vst.msk [vmem:[#allocation2 + $0x68] sm:$0xff] %vm872, %v851
        %887 = vst.msk [vmem:[#allocation2 + $0x70] sm:$0xff] %vm872, %v853
        %888 = vst.msk [vmem:[#allocation2 + $0x78] sm:$0xff] %vm872, %v855
        %v889 = vrot.slane %v287, 2
        %v890 = vrot.slane %v288, 2
        %v891 = vsel %vm437, %v889, %v890
        %v892 = vrot.slane %v289, 2
        %v893 = vsel %vm437, %v890, %v892
        %894 = vrot.lane.b32.xlu0 %v450, 32
        %v895 = vpop.permute.xlu0 %894
        %896 = vrot.lane.b32.xlu0 %v452, 32
        %v897 = vpop.permute.xlu0 %896
        %898 = vrot.lane.b32.xlu0 %v455, 32
        %v899 = vpop.permute.xlu0 %898
        %900 = vrot.lane.b32.xlu0 %v457, 32
        %v901 = vpop.permute.xlu0 %900
        %902 = vrot.lane.b32.xlu0 %v460, 32
        %v903 = vpop.permute.xlu0 %902
        %904 = vrot.lane.b32.xlu0 %v462, 32
        %v905 = vpop.permute.xlu0 %904
        %906 = vrot.lane.b32.xlu0 %v465, 32
        %v907 = vpop.permute.xlu0 %906
        %908 = vrot.lane.b32.xlu0 %v467, 32
        %v909 = vpop.permute.xlu0 %908
        %910 = vrot.lane.b32.xlu0 %v470, 32
        %v911 = vpop.permute.xlu0 %910
        %912 = vrot.lane.b32.xlu0 %v472, 32
        %v913 = vpop.permute.xlu0 %912
        %914 = vrot.lane.b32.xlu0 %v475, 32
        %v915 = vpop.permute.xlu0 %914
        %916 = vrot.lane.b32.xlu0 %v477, 32
        %v917 = vpop.permute.xlu0 %916
        %918 = vrot.lane.b32.xlu0 %v683, 32
        %v919 = vpop.permute.xlu0 %918
        %920 = vrot.lane.b32.xlu0 %v685, 32
        %v921 = vpop.permute.xlu0 %920
        %922 = vrot.lane.b32.xlu0 %v891, 32
        %v923 = vpop.permute.xlu0 %922
        %924 = vrot.lane.b32.xlu0 %v893, 32
        %v925 = vpop.permute.xlu0 %924
        %vm942 = vcmask 294144
        %943 = vst.msk [vmem:[#allocation2] sm:$0xff] %vm942, %v895
        %944 = vst.msk [vmem:[#allocation2 + $0x8] sm:$0xff] %vm942, %v897
        %945 = vst.msk [vmem:[#allocation2 + $0x10] sm:$0xff] %vm942, %v899
        %946 = vst.msk [vmem:[#allocation2 + $0x18] sm:$0xff] %vm942, %v901
        %947 = vst.msk [vmem:[#allocation2 + $0x20] sm:$0xff] %vm942, %v903
        %948 = vst.msk [vmem:[#allocation2 + $0x28] sm:$0xff] %vm942, %v905
        %949 = vst.msk [vmem:[#allocation2 + $0x30] sm:$0xff] %vm942, %v907
        %950 = vst.msk [vmem:[#allocation2 + $0x38] sm:$0xff] %vm942, %v909
        %951 = vst.msk [vmem:[#allocation2 + $0x40] sm:$0xff] %vm942, %v911
        %952 = vst.msk [vmem:[#allocation2 + $0x48] sm:$0xff] %vm942, %v913
        %953 = vst.msk [vmem:[#allocation2 + $0x50] sm:$0xff] %vm942, %v915
        %954 = vst.msk [vmem:[#allocation2 + $0x58] sm:$0xff] %vm942, %v917
        %955 = vst.msk [vmem:[#allocation2 + $0x60] sm:$0xff] %vm942, %v919
        %956 = vst.msk [vmem:[#allocation2 + $0x68] sm:$0xff] %vm942, %v921
        %957 = vst.msk [vmem:[#allocation2 + $0x70] sm:$0xff] %vm942, %v923
        %958 = vst.msk [vmem:[#allocation2 + $0x78] sm:$0xff] %vm942, %v925
        %v959 = vld [vmem:[#allocation2] sm:$0xff]
        %v960 = vld [vmem:[#allocation2 + $0x8] sm:$0xff]
        %v961 = vld [vmem:[#allocation2 + $0x10] sm:$0xff]
        %v962 = vld [vmem:[#allocation2 + $0x18] sm:$0xff]
        %v963 = vld [vmem:[#allocation2 + $0x20] sm:$0xff]
        %v964 = vld [vmem:[#allocation2 + $0x28] sm:$0xff]
        %v965 = vld [vmem:[#allocation2 + $0x30] sm:$0xff]
        %v966 = vld [vmem:[#allocation2 + $0x38] sm:$0xff]
        %v967 = vld [vmem:[#allocation2 + $0x40] sm:$0xff]
        %v968 = vld [vmem:[#allocation2 + $0x48] sm:$0xff]
        %v969 = vld [vmem:[#allocation2 + $0x50] sm:$0xff]
        %v970 = vld [vmem:[#allocation2 + $0x58] sm:$0xff]
        %v971 = vld [vmem:[#allocation2 + $0x60] sm:$0xff]
        %v972 = vld [vmem:[#allocation2 + $0x68] sm:$0xff]
        %v973 = vld [vmem:[#allocation2 + $0x70] sm:$0xff]
        %v974 = vld [vmem:[#allocation2 + $0x78] sm:$0xff]
        %v975 = vld [vmem:[%s1] sm:$0xff]
        %v976 = vld [vmem:[%s1 + $0x8] sm:$0xff]
        %v977 = vld [vmem:[%s1 + $0x10] sm:$0xff]
        %v978 = vld [vmem:[%s1 + $0x18] sm:$0xff]
        %v979 = vld [vmem:[%s1 + $0x20] sm:$0xf]
        %v980 = vld [vmem:[%s2] sm:$0x1]
        %v982 = vlaneseq
        %v983 = vshrl.u32 %v982, 7
        %v984 = vsub.s32 0, %v983
        %v985 = vrot.slane %v980, %v984
        %vm987 = vcmask 293888
        %v989 = vsel %vm987, %v959, 0
        %v992 = vsel %vm987, %v960, 0
        %v995 = vsel %vm987, %v961, 0
        %v998 = vsel %vm987, %v962, 0
        %v1001 = vsel %vm987, %v963, 0
        %v1004 = vsel %vm987, %v964, 0
        %v1007 = vsel %vm987, %v965, 0
        %v1010 = vsel %vm987, %v966, 0
        %v1013 = vsel %vm987, %v967, 0
        %v1016 = vsel %vm987, %v968, 0
        %v1019 = vsel %vm987, %v969, 0
        %v1022 = vsel %vm987, %v970, 0
        %v1025 = vsel %vm987, %v971, 0
        %v1028 = vsel %vm987, %v972, 0
        %v1031 = vsel %vm987, %v973, 0
        %v1034 = vsel %vm987, %v974, 0
        %vm1036 = vcmask 1043456
        %v1038 = vsel %vm1036, %v979, 0
        %1040 = vmatprep.subr.mxu0 0.0
        %1041 = vmatpush1.msra.mxu0 0.0
        %1042 = vmatprep.subr.mxu0 0.0
        %1043 = vmatpush1.msra.mxu0 0.0
        %1044 = vmatprep.subr.mxu0 0.0
        %1045 = vmatpush1.msra.mxu0 0.0
        %1046 = vmatprep.subr.mxu0 0.0
        %1047 = vmatpush1.msra.mxu0 0.0
        %1048 = vmatprep.subr.mxu0 0.0
        %1049 = vmatpush1.msra.mxu0 0.0
        %1050 = vmatprep.subr.mxu0 0.0
        %1051 = vmatpush1.msra.mxu0 0.0
        %1052 = vmatprep.subr.mxu0 0.0
        %1053 = vmatpush1.msra.mxu0 0.0
        %1054 = vmatprep.subr.mxu0 0.0
        %1055 = vmatpush1.msra.mxu0 0.0
        %1056 = vmatprep.subr.mxu0 0.0
        %1057 = vmatpush1.msra.mxu0 0.0
        %1058 = vmatprep.subr.mxu0 0.0
        %1059 = vmatpush1.msra.mxu0 0.0
        %1060 = vmatprep.subr.mxu0 0.0
        %1061 = vmatpush1.msra.mxu0 0.0
        %1062 = vmatprep.subr.mxu0 0.0
        %1063 = vmatpush1.msra.mxu0 %v1038
        %1064 = vmatprep.subr.mxu0 0.0
        %1065 = vmatpush1.msra.mxu0 %v978
        %1066 = vmatprep.subr.mxu0 0.0
        %1067 = vmatpush1.msra.mxu0 %v977
        %1068 = vmatprep.subr.mxu0 0.0
        %1069 = vmatpush1.msra.mxu0 %v976
        %1070 = vmatprep.subr.mxu0 0.0
        %1071 = vmatpush1.msra.mxu0 %v975
        %1072 = vmatprep.subr.mxu0 0.0
        %1073 = vmatpush2.msra.mxu0 0.0
        %1074 = vmatprep.subr.mxu0 0.0
        %1075 = vmatpush2.msra.mxu0 0.0
        %1076 = vmatprep.subr.mxu0 0.0
        %1077 = vmatpush2.msra.mxu0 0.0
        %1078 = vmatprep.subr.mxu0 0.0
        %1079 = vmatpush2.msra.mxu0 0.0
        %1080 = vmatprep.subr.mxu0 0.0
        %1081 = vmatpush2.msra.mxu0 0.0
        %1082 = vmatprep.subr.mxu0 0.0
        %1083 = vmatpush2.msra.mxu0 0.0
        %1084 = vmatprep.subr.mxu0 0.0
        %1085 = vmatpush2.msra.mxu0 0.0
        %1086 = vmatprep.subr.mxu0 0.0
        %1087 = vmatpush2.msra.mxu0 0.0
        %1088 = vmatprep.subr.mxu0 0.0
        %1089 = vmatpush2.msra.mxu0 0.0
        %1090 = vmatprep.subr.mxu0 0.0
        %1091 = vmatpush2.msra.mxu0 0.0
        %1092 = vmatprep.subr.mxu0 0.0
        %1093 = vmatpush2.msra.mxu0 0.0
        %1094 = vmatprep.subr.mxu0 0.0
        %1095 = vmatpush2.msra.mxu0 0.0
        %1096 = vmatprep.subr.mxu0 0.0
        %1097 = vmatpush2.msra.mxu0 0.0
        %1098 = vmatprep.subr.mxu0 0.0
        %1099 = vmatpush2.msra.mxu0 0.0
        %1100 = vmatprep.subr.mxu0 0.0
        %1101 = vmatpush2.msra.mxu0 0.0
        %1102 = vmatprep.subr.mxu0 0.0
        %1103 = vmatpush2.msra.mxu0 0.0
        %1104 = vmatprep.mubr.f32.mxu0 0.0
        %1105 = vmatmul.mubr.f32.gmra.mxu0 %v989
        %v1106 = vpop.f32.mrf.mxu0
        %v1107 = vadd.f32 %v985, %v1106
        %v1108 = vpop.f32.mrf.mxu0
        %1109 = vmatprep.mubr.f32.mxu0 0.0
        %1110 = vmatmul.mubr.f32.gmra.mxu0 %v992
        %v1111 = vpop.f32.mrf.mxu0
        %v1112 = vadd.f32 %v985, %v1111
        %v1113 = vpop.f32.mrf.mxu0
        %1114 = vmatprep.mubr.f32.mxu0 0.0
        %1115 = vmatmul.mubr.f32.gmra.mxu0 %v995
        %v1116 = vpop.f32.mrf.mxu0
        %v1117 = vadd.f32 %v985, %v1116
        %v1118 = vpop.f32.mrf.mxu0
        %1119 = vmatprep.mubr.f32.mxu0 0.0
        %1120 = vmatmul.mubr.f32.gmra.mxu0 %v998
        %v1121 = vpop.f32.mrf.mxu0
        %v1122 = vadd.f32 %v985, %v1121
        %v1123 = vpop.f32.mrf.mxu0
        %1124 = vmatprep.mubr.f32.mxu0 0.0
        %1125 = vmatmul.mubr.f32.gmra.mxu0 %v1001
        %v1126 = vpop.f32.mrf.mxu0
        %v1127 = vadd.f32 %v985, %v1126
        %v1128 = vpop.f32.mrf.mxu0
        %1129 = vmatprep.mubr.f32.mxu0 0.0
        %1130 = vmatmul.mubr.f32.gmra.mxu0 %v1004
        %v1131 = vpop.f32.mrf.mxu0
        %v1132 = vadd.f32 %v985, %v1131
        %v1133 = vpop.f32.mrf.mxu0
        %1134 = vmatprep.mubr.f32.mxu0 0.0
        %1135 = vmatmul.mubr.f32.gmra.mxu0 %v1007
        %v1136 = vpop.f32.mrf.mxu0
        %v1137 = vadd.f32 %v985, %v1136
        %v1138 = vpop.f32.mrf.mxu0
        %1139 = vmatprep.mubr.f32.mxu0 0.0
        %1140 = vmatmul.mubr.f32.gmra.mxu0 %v1010
        %v1141 = vpop.f32.mrf.mxu0
        %v1142 = vadd.f32 %v985, %v1141
        %v1143 = vpop.f32.mrf.mxu0
        %1144 = vmatprep.mubr.f32.mxu0 0.0
        %1145 = vmatmul.mubr.f32.gmra.mxu0 %v1013
        %v1146 = vpop.f32.mrf.mxu0
        %v1147 = vadd.f32 %v985, %v1146
        %v1148 = vpop.f32.mrf.mxu0
        %1149 = vmatprep.mubr.f32.mxu0 0.0
        %1150 = vmatmul.mubr.f32.gmra.mxu0 %v1016
        %v1151 = vpop.f32.mrf.mxu0
        %v1152 = vadd.f32 %v985, %v1151
        %v1153 = vpop.f32.mrf.mxu0
        %1154 = vmatprep.mubr.f32.mxu0 0.0
        %1155 = vmatmul.mubr.f32.gmra.mxu0 %v1019
        %v1156 = vpop.f32.mrf.mxu0
        %v1157 = vadd.f32 %v985, %v1156
        %v1158 = vpop.f32.mrf.mxu0
        %1159 = vmatprep.mubr.f32.mxu0 0.0
        %1160 = vmatmul.mubr.f32.gmra.mxu0 %v1022
        %v1161 = vpop.f32.mrf.mxu0
        %v1162 = vadd.f32 %v985, %v1161
        %v1163 = vpop.f32.mrf.mxu0
        %1164 = vmatprep.mubr.f32.mxu0 0.0
        %1165 = vmatmul.mubr.f32.gmra.mxu0 %v1025
        %v1166 = vpop.f32.mrf.mxu0
        %v1167 = vadd.f32 %v985, %v1166
        %v1168 = vpop.f32.mrf.mxu0
        %1169 = vmatprep.mubr.f32.mxu0 0.0
        %1170 = vmatmul.mubr.f32.gmra.mxu0 %v1028
        %v1171 = vpop.f32.mrf.mxu0
        %v1172 = vadd.f32 %v985, %v1171
        %v1173 = vpop.f32.mrf.mxu0
        %1174 = vmatprep.mubr.f32.mxu0 0.0
        %1175 = vmatmul.mubr.f32.gmra.mxu0 %v1031
        %v1176 = vpop.f32.mrf.mxu0
        %v1177 = vadd.f32 %v985, %v1176
        %v1178 = vpop.f32.mrf.mxu0
        %1179 = vmatprep.mubr.f32.mxu0 0.0
        %1180 = vmatmul.mubr.f32.gmra.mxu0 %v1034
        %v1181 = vpop.f32.mrf.mxu0
        %v1182 = vadd.f32 %v985, %v1181
        %v1183 = vpop.f32.mrf.mxu0
        %1184 = vdwg.mxu0
        %vm1185 = vcmask 64512
        %v1186 = vsel %vm1185, %v1107, 0.0
        %v1187 = vsel %vm1185, %v1112, 0.0
        %v1188 = vadd.f32 %v1186, %v1187
        %v1189 = vsel %vm1185, %v1117, 0.0
        %v1190 = vadd.f32 %v1188, %v1189
        %v1191 = vsel %vm1185, %v1122, 0.0
        %v1192 = vadd.f32 %v1190, %v1191
        %v1193 = vsel %vm1185, %v1127, 0.0
        %v1194 = vadd.f32 %v1192, %v1193
        %v1195 = vsel %vm1185, %v1132, 0.0
        %v1196 = vadd.f32 %v1194, %v1195
        %v1197 = vsel %vm1185, %v1137, 0.0
        %v1198 = vadd.f32 %v1196, %v1197
        %v1199 = vsel %vm1185, %v1142, 0.0
        %v1200 = vadd.f32 %v1198, %v1199
        %v1201 = vsel %vm1185, %v1147, 0.0
        %v1202 = vadd.f32 %v1200, %v1201
        %v1203 = vsel %vm1185, %v1152, 0.0
        %v1204 = vadd.f32 %v1202, %v1203
        %v1205 = vsel %vm1185, %v1157, 0.0
        %v1206 = vadd.f32 %v1204, %v1205
        %v1207 = vsel %vm1185, %v1162, 0.0
        %v1208 = vadd.f32 %v1206, %v1207
        %v1209 = vsel %vm1185, %v1167, 0.0
        %v1210 = vadd.f32 %v1208, %v1209
        %v1211 = vsel %vm1185, %v1172, 0.0
        %v1212 = vadd.f32 %v1210, %v1211
        %v1213 = vsel %vm1185, %v1177, 0.0
        %v1214 = vadd.f32 %v1212, %v1213
        %v1215 = vsel %vm1185, %v1182, 0.0
        %v1216 = vadd.f32 %v1214, %v1215
        %v1217 = vrot.slane %v1216, 4
        %v1218 = vadd.f32 %v1216, %v1217
        %v1219 = vrot.slane %v1218, 2
        %v1220 = vadd.f32 %v1218, %v1219
        %v1221 = vrot.slane %v1220, 1
        %v1222 = vadd.f32 %v1220, %v1221
        %vm1223 = vcmask 57344
        %1224 = vst.msk [vmem:[%s245] sm:$0x1] %vm1223, %v1222
        %v1225 = vmul.f32 %v1107, %v1107
        %v1226 = vmul.f32 %v1112, %v1112
        %v1227 = vmul.f32 %v1117, %v1117
        %v1228 = vmul.f32 %v1122, %v1122
        %v1229 = vmul.f32 %v1127, %v1127
        %v1230 = vmul.f32 %v1132, %v1132
        %v1231 = vmul.f32 %v1137, %v1137
        %v1232 = vmul.f32 %v1142, %v1142
        %v1233 = vmul.f32 %v1147, %v1147
        %v1234 = vmul.f32 %v1152, %v1152
        %v1235 = vmul.f32 %v1157, %v1157
        %v1236 = vmul.f32 %v1162, %v1162
        %v1237 = vmul.f32 %v1167, %v1167
        %v1238 = vmul.f32 %v1172, %v1172
        %v1239 = vmul.f32 %v1177, %v1177
        %v1240 = vmul.f32 %v1182, %v1182
        %v1241 = vsel %vm1185, %v1225, 0.0
        %v1242 = vsel %vm1185, %v1226, 0.0
        %v1243 = vadd.f32 %v1241, %v1242
        %v1244 = vsel %vm1185, %v1227, 0.0
        %v1245 = vadd.f32 %v1243, %v1244
        %v1246 = vsel %vm1185, %v1228, 0.0
        %v1247 = vadd.f32 %v1245, %v1246
        %v1248 = vsel %vm1185, %v1229, 0.0
        %v1249 = vadd.f32 %v1247, %v1248
        %v1250 = vsel %vm1185, %v1230, 0.0
        %v1251 = vadd.f32 %v1249, %v1250
        %v1252 = vsel %vm1185, %v1231, 0.0
        %v1253 = vadd.f32 %v1251, %v1252
        %v1254 = vsel %vm1185, %v1232, 0.0
        %v1255 = vadd.f32 %v1253, %v1254
        %v1256 = vsel %vm1185, %v1233, 0.0
        %v1257 = vadd.f32 %v1255, %v1256
        %v1258 = vsel %vm1185, %v1234, 0.0
        %v1259 = vadd.f32 %v1257, %v1258
        %v1260 = vsel %vm1185, %v1235, 0.0
        %v1261 = vadd.f32 %v1259, %v1260
        %v1262 = vsel %vm1185, %v1236, 0.0
        %v1263 = vadd.f32 %v1261, %v1262
        %v1264 = vsel %vm1185, %v1237, 0.0
        %v1265 = vadd.f32 %v1263, %v1264
        %v1266 = vsel %vm1185, %v1238, 0.0
        %v1267 = vadd.f32 %v1265, %v1266
        %v1268 = vsel %vm1185, %v1239, 0.0
        %v1269 = vadd.f32 %v1267, %v1268
        %v1270 = vsel %vm1185, %v1240, 0.0
        %v1271 = vadd.f32 %v1269, %v1270
        %v1272 = vrot.slane %v1271, 4
        %v1273 = vadd.f32 %v1271, %v1272
        %v1274 = vrot.slane %v1273, 2
        %v1275 = vadd.f32 %v1273, %v1274
        %v1276 = vrot.slane %v1275, 1
        %v1277 = vadd.f32 %v1275, %v1276
        %1278 = vst.msk [vmem:[%s251] sm:$0x1] %vm1223, %v1277
        %v1287 = vrot.slane %v1117, 7
        %vm1288 = vcmask 1041409
        %v1289 = vsel %vm1288, %v1287, %v1107
        %v1290 = vrot.slane %v1127, 6
        %vm1291 = vcmask 1042434
        %v1292 = vsel %vm1291, %v1290, %v1289
        %v1293 = vrot.slane %v1137, 5
        %vm1294 = vcmask 1043459
        %v1295 = vsel %vm1294, %v1293, %v1292
        %v1296 = vrot.slane %v1147, 4
        %vm1297 = vcmask 1044484
        %v1298 = vsel %vm1297, %v1296, %v1295
        %v1299 = vrot.slane %v1157, 3
        %vm1300 = vcmask 1045509
        %v1301 = vsel %vm1300, %v1299, %v1298
        %v1302 = vrot.slane %v1167, 2
        %vm1303 = vcmask 1046534
        %v1304 = vsel %vm1303, %v1302, %v1301
        %v1305 = vrot.slane %v1177, 1
        %vm1306 = vcmask 1047559
        %v1307 = vsel %vm1306, %v1305, %v1304
        %1309 = vst.msk [vmem:[%s239] sm:$0xff] %vm1185, %v1307
        %v1310 = vsel %vm1291, %v1287, %v1107
        %v1311 = vsel %vm1294, %v1290, %v1310
        %v1312 = vsel %vm1297, %v1293, %v1311
        %v1313 = vsel %vm1300, %v1296, %v1312
        %v1314 = vsel %vm1303, %v1299, %v1313
        %v1315 = vsel %vm1306, %v1302, %v1314
        %1316 = vrot.lane.b32.xlu0 %v1315, 8
        %v1317 = vpop.permute.xlu0 %1316
        %1318 = vrot.lane.b32.xlu0 %v1305, 8
        %v1319 = vpop.permute.xlu0 %1318
        %vm1322 = vcmask 130113
        %1323 = vst.msk [vmem:[%s239 - $0x1] sm:$0xfe] %vm1322, %v1317
        %vm1324 = vcmask 122944
        %1325 = vst.msk [vmem:[%s239 + $0x7] sm:$0x1] %vm1324, %v1319
        %v1326 = vsel %vm1294, %v1287, %v1107
        %v1327 = vsel %vm1297, %v1290, %v1326
        %v1328 = vsel %vm1300, %v1293, %v1327
        %v1329 = vsel %vm1303, %v1296, %v1328
        %v1330 = vsel %vm1306, %v1299, %v1329
        %v1331 = vsel %vm1288, %v1305, %v1302
        %1332 = vrot.lane.b32.xlu0 %v1330, 16
        %v1333 = vpop.permute.xlu0 %1332
        %1334 = vrot.lane.b32.xlu0 %v1331, 16
        %v1335 = vpop.permute.xlu0 %1334
        %vm1338 = vcmask 195714
        %1339 = vst.msk [vmem:[%s239 - $0x2] sm:$0xfc] %vm1338, %v1333
        %vm1340 = vcmask 189568
        %1341 = vst.msk [vmem:[%s239 + $0x6] sm:$0x3] %vm1340, %v1335
        %v1342 = vsel %vm1297, %v1287, %v1107
        %v1343 = vsel %vm1300, %v1290, %v1342
        %v1344 = vsel %vm1303, %v1293, %v1343
        %v1345 = vsel %vm1306, %v1296, %v1344
        %v1346 = vsel %vm1288, %v1302, %v1299
        %v1347 = vsel %vm1291, %v1305, %v1346
        %1348 = vrot.lane.b32.xlu0 %v1345, 24
        %v1349 = vpop.permute.xlu0 %1348
        %1350 = vrot.lane.b32.xlu0 %v1347, 24
        %v1351 = vpop.permute.xlu0 %1350
        %vm1354 = vcmask 261315
        %1355 = vst.msk [vmem:[%s239 - $0x3] sm:$0xf8] %vm1354, %v1349
        %vm1356 = vcmask 256192
        %1357 = vst.msk [vmem:[%s239 + $0x5] sm:$0x7] %vm1356, %v1351
        %v1358 = vsel %vm1300, %v1287, %v1107
        %v1359 = vsel %vm1303, %v1290, %v1358
        %v1360 = vsel %vm1306, %v1293, %v1359
        %v1361 = vsel %vm1288, %v1299, %v1296
        %v1362 = vsel %vm1291, %v1302, %v1361
        %v1363 = vsel %vm1294, %v1305, %v1362
        %1364 = vrot.lane.b32.xlu0 %v1360, 32
        %v1365 = vpop.permute.xlu0 %1364
        %1366 = vrot.lane.b32.xlu0 %v1363, 32
        %v1367 = vpop.permute.xlu0 %1366
        %vm1370 = vcmask 326916
        %1371 = vst.msk [vmem:[%s239 - $0x4] sm:$0xf0] %vm1370, %v1365
        %vm1372 = vcmask 322816
        %1373 = vst.msk [vmem:[%s239 + $0x4] sm:$0xf] %vm1372, %v1367
        %v1374 = vsel %vm1303, %v1287, %v1107
        %v1375 = vsel %vm1306, %v1290, %v1374
        %v1376 = vsel %vm1288, %v1296, %v1293
        %v1377 = vsel %vm1291, %v1299, %v1376
        %v1378 = vsel %vm1294, %v1302, %v1377
        %v1379 = vsel %vm1297, %v1305, %v1378
        %1380 = vrot.lane.b32.xlu0 %v1375, 40
        %v1381 = vpop.permute.xlu0 %1380
        %1382 = vrot.lane.b32.xlu0 %v1379, 40
        %v1383 = vpop.permute.xlu0 %1382
        %vm1386 = vcmask 392517
        %1387 = vst.msk [vmem:[%s239 - $0x5] sm:$0xe0] %vm1386, %v1381
        %vm1388 = vcmask 389440
        %1389 = vst.msk [vmem:[%s239 + $0x3] sm:$0x1f] %vm1388, %v1383
        %v1390 = vsel %vm1306, %v1287, %v1107
        %v1391 = vsel %vm1288, %v1293, %v1290
        %v1392 = vsel %vm1291, %v1296, %v1391
        %v1393 = vsel %vm1294, %v1299, %v1392
        %v1394 = vsel %vm1297, %v1302, %v1393
        %v1395 = vsel %vm1300, %v1305, %v1394
        %1396 = vrot.lane.b32.xlu0 %v1390, 48
        %v1397 = vpop.permute.xlu0 %1396
        %1398 = vrot.lane.b32.xlu0 %v1395, 48
        %v1399 = vpop.permute.xlu0 %1398
        %vm1402 = vcmask 458118
        %1403 = vst.msk [vmem:[%s239 - $0x6] sm:$0xc0] %vm1402, %v1397
        %vm1404 = vcmask 456064
        %1405 = vst.msk [vmem:[%s239 + $0x2] sm:$0x3f] %vm1404, %v1399
        %v1406 = vsel %vm1288, %v1290, %v1287
        %v1407 = vsel %vm1291, %v1293, %v1406
        %v1408 = vsel %vm1294, %v1296, %v1407
        %v1409 = vsel %vm1297, %v1299, %v1408
        %v1410 = vsel %vm1300, %v1302, %v1409
        %v1411 = vsel %vm1303, %v1305, %v1410
        %1412 = vrot.lane.b32.xlu0 %v1107, 56
        %v1413 = vpop.permute.xlu0 %1412
        %1414 = vrot.lane.b32.xlu0 %v1411, 56
        %v1415 = vpop.permute.xlu0 %1414
        %vm1418 = vcmask 523719
        %1419 = vst.msk [vmem:[%s239 - $0x7] sm:$0x80] %vm1418, %v1413
        %vm1420 = vcmask 522688
        %1421 = vst.msk [vmem:[%s239 + $0x1] sm:$0x7f] %vm1420, %v1415
        %v1430 = vrot.slane %v1122, 7
        %v1431 = vsel %vm1288, %v1430, %v1112
        %v1432 = vrot.slane %v1132, 6
        %v1433 = vsel %vm1291, %v1432, %v1431
        %v1434 = vrot.slane %v1142, 5
        %v1435 = vsel %vm1294, %v1434, %v1433
        %v1436 = vrot.slane %v1152, 4
        %v1437 = vsel %vm1297, %v1436, %v1435
        %v1438 = vrot.slane %v1162, 3
        %v1439 = vsel %vm1300, %v1438, %v1437
        %v1440 = vrot.slane %v1172, 2
        %v1441 = vsel %vm1303, %v1440, %v1439
        %v1442 = vrot.slane %v1182, 1
        %v1443 = vsel %vm1306, %v1442, %v1441
        %1444 = vrot.lane.b32.xlu0 %v1443, 64
        %v1445 = vpop.permute.xlu0 %1444
        %vm1447 = vcmask 589312
        %1448 = vst.msk [vmem:[%s239] sm:$0xff] %vm1447, %v1445
        %v1449 = vsel %vm1291, %v1430, %v1112
        %v1450 = vsel %vm1294, %v1432, %v1449
        %v1451 = vsel %vm1297, %v1434, %v1450
        %v1452 = vsel %vm1300, %v1436, %v1451
        %v1453 = vsel %vm1303, %v1438, %v1452
        %v1454 = vsel %vm1306, %v1440, %v1453
        %1455 = vrot.lane.b32.xlu0 %v1454, 72
        %v1456 = vpop.permute.xlu0 %1455
        %1457 = vrot.lane.b32.xlu0 %v1442, 72
        %v1458 = vpop.permute.xlu0 %1457
        %vm1461 = vcmask 654913
        %1462 = vst.msk [vmem:[%s239 - $0x1] sm:$0xfe] %vm1461, %v1456
        %vm1463 = vcmask 647744
        %1464 = vst.msk [vmem:[%s239 + $0x7] sm:$0x1] %vm1463, %v1458
        %v1465 = vsel %vm1294, %v1430, %v1112
        %v1466 = vsel %vm1297, %v1432, %v1465
        %v1467 = vsel %vm1300, %v1434, %v1466
        %v1468 = vsel %vm1303, %v1436, %v1467
        %v1469 = vsel %vm1306, %v1438, %v1468
        %v1470 = vsel %vm1288, %v1442, %v1440
        %1471 = vrot.lane.b32.xlu0 %v1469, 80
        %v1472 = vpop.permute.xlu0 %1471
        %1473 = vrot.lane.b32.xlu0 %v1470, 80
        %v1474 = vpop.permute.xlu0 %1473
        %vm1477 = vcmask 720514
        %1478 = vst.msk [vmem:[%s239 - $0x2] sm:$0xfc] %vm1477, %v1472
        %vm1479 = vcmask 714368
        %1480 = vst.msk [vmem:[%s239 + $0x6] sm:$0x3] %vm1479, %v1474
        %v1481 = vsel %vm1297, %v1430, %v1112
        %v1482 = vsel %vm1300, %v1432, %v1481
        %v1483 = vsel %vm1303, %v1434, %v1482
        %v1484 = vsel %vm1306, %v1436, %v1483
        %v1485 = vsel %vm1288, %v1440, %v1438
        %v1486 = vsel %vm1291, %v1442, %v1485
        %1487 = vrot.lane.b32.xlu0 %v1484, 88
        %v1488 = vpop.permute.xlu0 %1487
        %1489 = vrot.lane.b32.xlu0 %v1486, 88
        %v1490 = vpop.permute.xlu0 %1489
        %vm1493 = vcmask 786115
        %1494 = vst.msk [vmem:[%s239 - $0x3] sm:$0xf8] %vm1493, %v1488
        %vm1495 = vcmask 780992
        %1496 = vst.msk [vmem:[%s239 + $0x5] sm:$0x7] %vm1495, %v1490
        %v1497 = vsel %vm1300, %v1430, %v1112
        %v1498 = vsel %vm1303, %v1432, %v1497
        %v1499 = vsel %vm1306, %v1434, %v1498
        %v1500 = vsel %vm1288, %v1438, %v1436
        %v1501 = vsel %vm1291, %v1440, %v1500
        %v1502 = vsel %vm1294, %v1442, %v1501
        %1503 = vrot.lane.b32.xlu0 %v1499, 96
        %v1504 = vpop.permute.xlu0 %1503
        %1505 = vrot.lane.b32.xlu0 %v1502, 96
        %v1506 = vpop.permute.xlu0 %1505
        %vm1509 = vcmask 851716
        %1510 = vst.msk [vmem:[%s239 - $0x4] sm:$0xf0] %vm1509, %v1504
        %vm1511 = vcmask 847616
        %1512 = vst.msk [vmem:[%s239 + $0x4] sm:$0xf] %vm1511, %v1506
        %v1513 = vsel %vm1303, %v1430, %v1112
        %v1514 = vsel %vm1306, %v1432, %v1513
        %v1515 = vsel %vm1288, %v1436, %v1434
        %v1516 = vsel %vm1291, %v1438, %v1515
        %v1517 = vsel %vm1294, %v1440, %v1516
        %v1518 = vsel %vm1297, %v1442, %v1517
        %1519 = vrot.lane.b32.xlu0 %v1514, 104
        %v1520 = vpop.permute.xlu0 %1519
        %1521 = vrot.lane.b32.xlu0 %v1518, 104
        %v1522 = vpop.permute.xlu0 %1521
        %vm1525 = vcmask 917317
        %1526 = vst.msk [vmem:[%s239 - $0x5] sm:$0xe0] %vm1525, %v1520
        %vm1527 = vcmask 914240
        %1528 = vst.msk [vmem:[%s239 + $0x3] sm:$0x1f] %vm1527, %v1522
        %v1529 = vsel %vm1306, %v1430, %v1112
        %v1530 = vsel %vm1288, %v1434, %v1432
        %v1531 = vsel %vm1291, %v1436, %v1530
        %v1532 = vsel %vm1294, %v1438, %v1531
        %v1533 = vsel %vm1297, %v1440, %v1532
        %v1534 = vsel %vm1300, %v1442, %v1533
        %1535 = vrot.lane.b32.xlu0 %v1529, 112
        %v1536 = vpop.permute.xlu0 %1535
        %1537 = vrot.lane.b32.xlu0 %v1534, 112
        %v1538 = vpop.permute.xlu0 %1537
        %vm1541 = vcmask 982918
        %1542 = vst.msk [vmem:[%s239 - $0x6] sm:$0xc0] %vm1541, %v1536
        %vm1543 = vcmask 980864
        %1544 = vst.msk [vmem:[%s239 + $0x2] sm:$0x3f] %vm1543, %v1538
        %v1545 = vsel %vm1288, %v1432, %v1430
        %v1546 = vsel %vm1291, %v1434, %v1545
        %v1547 = vsel %vm1294, %v1436, %v1546
        %v1548 = vsel %vm1297, %v1438, %v1547
        %v1549 = vsel %vm1300, %v1440, %v1548
        %v1550 = vsel %vm1303, %v1442, %v1549
        %1551 = vrot.lane.b32.xlu0 %v1112, 120
        %v1552 = vpop.permute.xlu0 %1551
        %1553 = vrot.lane.b32.xlu0 %v1550, 120
        %v1554 = vpop.permute.xlu0 %1553
        %vm1557 = vcmask 1048519
        %1558 = vst.msk [vmem:[%s239 - $0x7] sm:$0x80] %vm1557, %v1552
        %vm1559 = vcmask 1047488
        %1560 = vst.msk [vmem:[%s239 + $0x1] sm:$0x7f] %vm1559, %v1554
        %s1561 = sand.u32 %s113, 1
        %s1562 = scalar_lea.sflag [#allocation4], %s1561
        %s1563 = sand.u32 %s113, 1
        %s1564 = smul.addr %s1563, 8
        %s1565 = scalar_lea.vmem [#allocation3], %s1564
        %s1566 = sand.u32 %s23, 1
        %s1567 = scalar_lea.sflag [#allocation6], %s1566
        %s1568 = sand.u32 %s141, 1
        %s1569 = scalar_lea.vmem [#allocation5], %s1568
        %s1570 = sand.u32 %s23, 1
        %s1571 = scalar_lea.sflag [#allocation6], %s1570
        %s1572 = sand.u32 %s169, 1
        %s1573 = scalar_lea.vmem [#allocation7], %s1572
        // Predicated region
        $region33: #{tpu_custom_call.1} parent=31 // pred_check
          %p1574 = pneg %p123
        $region34: #{tpu_custom_call.1} parent=31 // pred_check_branch
          %1576 = sbr.rel (%p1574) target = $region36
        $region35: #{tpu_custom_call.1} parent=31 // pred_region
          %s1578 = ssub.s32 128, 128
          %1579 = vsyncadd %s1562, %s1578
          %s1580 = smul.addr %s27, 2
          %s1581 = sadd.s32 %s28, %s1580
          %s1582 = smul.addr %s1581, 128
          %s1583 = scalar_lea.hbm %s3, %s1582
          %s1585 = sshll.u32 %s1565, 4
          %s1586 = int_to_ptr.vmem [resolvable:$true] %s1585
          %1588 = dma.vmem_to_hbm [thread:$0]  %s1586, 128, %s1583, %s1562
        $region36: #{tpu_custom_call.1} parent=31 // pred_fallthru
          _
        // Predicated region
        $region37: #{tpu_custom_call.1} parent=31 // pred_check
          %p1589 = pneg %p151
        $region38: #{tpu_custom_call.1} parent=31 // pred_check_branch
          %1591 = sbr.rel (%p1589) target = $region40
        $region39: #{tpu_custom_call.1} parent=31 // pred_region
          %s1593 = ssub.s32 16, 16
          %1594 = vsyncadd %s1567, %s1593
          %s1595 = smul.addr %s27, 2
          %s1596 = sadd.s32 %s28, %s1595
          %s1597 = smul.addr %s1596, 16
          %s1598 = scalar_lea.hbm %s4, %s1597
          %s1600 = sshll.u32 %s1569, 4
          %s1601 = int_to_ptr.vmem [resolvable:$true] %s1600
          %1603 = dma.vmem_to_hbm [thread:$0]  %s1601, 16, %s1598, %s1567
        $region40: #{tpu_custom_call.1} parent=31 // pred_fallthru
          _
        // Predicated region
        $region41: #{tpu_custom_call.1} parent=31 // pred_check
          %p1604 = pneg %p179
        $region42: #{tpu_custom_call.1} parent=31 // pred_check_branch
          %1606 = sbr.rel (%p1604) target = $region44
        $region43: #{tpu_custom_call.1} parent=31 // pred_region
          %s1608 = ssub.s32 16, 16
          %1609 = vsyncadd %s1571, %s1608
          %s1610 = smul.addr %s27, 2
          %s1611 = sadd.s32 %s28, %s1610
          %s1612 = smul.addr %s1611, 16
          %s1613 = scalar_lea.hbm %s5, %s1612
          %s1615 = sshll.u32 %s1573, 4
          %s1616 = int_to_ptr.vmem [resolvable:$true] %s1615
          %1618 = dma.vmem_to_hbm [thread:$0]  %s1616, 16, %s1613, %s1571
        $region44: #{tpu_custom_call.1} parent=31 // pred_fallthru
          _
      $region32: #{tpu_custom_call.1} parent=5 // pred_fallthru
        _
      %p1619 = scmp.le.s32.totalorder 2, %s18
      // Predicated region
      $region45: #{tpu_custom_call.1} parent=5 // pred_check
        %p1620 = pneg %p1619
      $region46: #{tpu_custom_call.1} parent=5 // pred_check_branch
        %1622 = sbr.rel (%p1620) target = $region48
      $region47: #{tpu_custom_call.1} parent=5 // pred_region
        %s1623 = ssub.s32 %s18, 2
        // Predicated region
        $region49: #{tpu_custom_call.1} parent=47 // pred_check
          %p1624 = pneg %p129
        $region50: #{tpu_custom_call.1} parent=47 // pred_check_branch
          %1626 = sbr.rel (%p1624) target = $region52
        $region51: #{tpu_custom_call.1} parent=47 // pred_region
          %s1627 = sand.u32 %s114, 1
          %s1628 = scalar_lea.sflag [#allocation4], %s1627
          %s1629 = sand.u32 %s114, 1
          %s1630 = smul.addr %s1629, 8
          %s1631 = scalar_lea.vmem [#allocation3], %s1630
          %1632 = dma.done %s1628, 128
        $region52: #{tpu_custom_call.1} parent=47 // pred_fallthru
          _
        // Predicated region
        $region53: #{tpu_custom_call.1} parent=47 // pred_check
          %p1633 = pneg %p157
        $region54: #{tpu_custom_call.1} parent=47 // pred_check_branch
          %1635 = sbr.rel (%p1633) target = $region56
        $region55: #{tpu_custom_call.1} parent=47 // pred_region
          %s1636 = sand.u32 %s24, 1
          %s1637 = scalar_lea.sflag [#allocation6], %s1636
          %s1638 = sand.u32 %s142, 1
          %s1639 = scalar_lea.vmem [#allocation5], %s1638
          %1640 = dma.done %s1637, 16
        $region56: #{tpu_custom_call.1} parent=47 // pred_fallthru
          _
        // Predicated region
        $region57: #{tpu_custom_call.1} parent=47 // pred_check
          %p1641 = pneg %p185
        $region58: #{tpu_custom_call.1} parent=47 // pred_check_branch
          %1643 = sbr.rel (%p1641) target = $region60
        $region59: #{tpu_custom_call.1} parent=47 // pred_region
          %s1644 = sand.u32 %s24, 1
          %s1645 = scalar_lea.sflag [#allocation6], %s1644
          %s1646 = sand.u32 %s170, 1
          %s1647 = scalar_lea.vmem [#allocation7], %s1646
          %1648 = dma.done %s1645, 16
        $region60: #{tpu_custom_call.1} parent=47 // pred_fallthru
          _
      $region48: #{tpu_custom_call.1} parent=5 // pred_fallthru
        _
    $region6: #{tpu_custom_call.1} parent=1 // loop_footer
      %s22 = sadd.s32 1, %s18
    $region7: #{tpu_custom_call.1} parent=1 // loop_footer_branch
      %17 = sbr.rel target = $region3
    $region8: #{tpu_custom_call.1} parent=1 // loop_exit
      _
    %1649 = vsyncpa [#allocation4], 1
    %s1650 = scalar_lea.sflag [#allocation4], 1
    %1651 = vsyncpa %s1650, 1
    %1652 = vsyncpa [#allocation6], 1
    %s1653 = scalar_lea.sflag [#allocation6], 1
    %1654 = vsyncpa %s1653, 1

</llo_original>
